<compile_context>
chip_gen: v7x
topology: tpu7x:2x2x1
jax: 0.10.0
libtpu: 0.0.40
codegen_flags: <defaults>
</compile_context>

<pallas_src>
import functools

import numpy as np
import jax
import jax.numpy as jnp
from jax.experimental import pallas as pl
from jax.experimental.pallas import tpu as pltpu


def _round_up(x, m):
    return ((x + m - 1) // m) * m


# ----------------------------- Pallas kernel -------------------------------


def _upsample_network_kernel(m_ref, wc_ref, bc_ref, w1_ref, w2_ref, rbb_ref,
                             wout_ref, bout_ref,
                             mup_ref, aux_ref, *,
                             ksize, res_blocks, t_tile, taps, mxu_dtype):
    """One (batch, time-tile) grid step: MelResNet + conv_out + folded upsample FIR."""
    ts = len(taps)
    t = pl.program_id(1)
    row0 = pl.multiple_of(t * t_tile, 8)

    # Halo read of the (whole-)resident mel: (Tt + ksize - 1, F), f32.
    x = m_ref[0, pl.ds(row0, t_tile + ksize - 1), :]
    slc = [x[j:j + t_tile, :] for j in range(ksize)]        # ksize shifted (Tt, F) f32 slices

    # --- MelResNet: conv_in as one im2col matmul + 1x1-conv ResBlocks (BN folded) ---
    X = jnp.concatenate(slc, axis=1).astype(mxu_dtype)      # (Tt, ksize*F)
    h = jnp.dot(X, wc_ref[...], preferred_element_type=jnp.float32)
    h = jnp.maximum(h + bc_ref[...], 0.0)                   # (Tt, C), f32

    # TODO(synk): for production res_blocks (~10) with large Tt, switch to lax.fori_loop with
    #             dynamic w1_ref[r]/w2_ref[r]/rbb_ref[r] indexing to bound live ranges.
    for r in range(res_blocks):
        rbb = rbb_ref[r]                                     # (2, C) packed biases
        y = jnp.dot(h.astype(mxu_dtype), w1_ref[r], preferred_element_type=jnp.float32)
        y = jnp.maximum(y + rbb[0:1, :], 0.0)
        y = jnp.dot(y.astype(mxu_dtype), w2_ref[r], preferred_element_type=jnp.float32)
        h = h + y + rbb[1:2, :]

    # conv_out once at (Tt, O); resnet_stretch (Stretch2d(ts, 1)) == lane-tile at store time.
    aux_small = jnp.dot(h.astype(mxu_dtype), wout_ref[...],
                        preferred_element_type=jnp.float32) + bout_ref[...]
    aux_ref[0] = jnp.tile(aux_small, (1, ts)).astype(aux_ref.dtype)

    # --- whole up_layers chain (Stretch2d + box convs + indent crop) folded to constant
    #     per-phase FIR taps baked as immediates: ts*ksize VPU scaled-adds, full f32. ---
    cols = []
    for p in range(ts):
        acc = taps[p][0] * slc[0]
        for j in range(1, ksize):
            acc = acc + taps[p][j] * slc[j]
        cols.append(acc)
    mup_ref[0] = jnp.concatenate(cols, axis=1).astype(mup_ref.dtype)


# --------------------- constant polyphase-filter folding --------------------


def _polyphase_taps(scales, pad, T=None):
    """Fold the Stretch2d / box-filter chain (+ indent crop) into per-phase FIR taps.

    Returns taps of shape (total_scale, ksize) such that
        m_up[t'*total_scale + p, f] == sum_j taps[p, j] * m[t' + j, f].

    Computed and verified on a small fixed probe length (independent of the real mel
    length): the composed chain's boundary effects are confined to < 2 input frames,
    so a probe covering both boundaries plus an interior row is exhaustive for any
    longer input. Host cost is O(pad^2 * ts) instead of O(T^2 * ts).
    """
    ts = int(np.prod(scales))
    ksize = 2 * pad + 1
    Tp = 4 * pad + 4
    if T is not None:
        Tp = min(Tp, T)              # for very short inputs verify at the exact length
    Tp_out = Tp - 2 * pad

    x = np.eye(Tp, dtype=np.float64)
    for s in scales:
        x = np.repeat(x, s, axis=0)
        W = x.shape[0]
        xp = np.pad(x, ((s, s), (0, 0)))
        x = sum(xp[j:j + W] for j in range(2 * s + 1)) / (2 * s + 1)
    U = x[pad * ts: x.shape[0] - pad * ts]                  # (Tp_out*ts, Tp)

    t_ref = Tp_out // 2                                     # interior reference row block
    taps = np.stack([U[t_ref * ts + p, t_ref:t_ref + ksize] for p in range(ts)])

    # Verify the banded / shift-invariant decomposition is exact everywhere on the probe.
    recon = np.zeros_like(U)
    for tp in range(Tp_out):
        recon[tp * ts:(tp + 1) * ts, tp:tp + ksize] = taps
    if not np.allclose(recon, U, atol=1e-9):
        # TODO(synk): configs whose composed filter support exceeds the conv_in window
        #             (e.g. pad too small for the scales) would need a wider FIR window.
        raise NotImplementedError(
            "upsample chain does not reduce to conv_in-window polyphase taps")
    return taps


# ------------------------------ JAX wrapper ---------------------------------


def upsample_network_forward(m_btf, params, *, upsample_scales, pad,
                             mxu_dtype=jnp.bfloat16, out_dtype=jnp.bfloat16,
                             t_tile=None, vmem_limit_bytes=48 * 1024 * 1024):
    (w_in, s_in, b_in, w1, s1, b1, w2, s2, b2, w_out, b_out) = params
    B, T, F = m_btf.shape
    ksize = 2 * pad + 1
    assert w_in.shape[0] == ksize
    R = w1.shape[0]
    C = w_in.shape[2]
    O = w_out.shape[1]
    ts = int(np.prod(upsample_scales))
    T_out = T - 2 * pad
    L = T_out * ts

    # --- constant per-phase FIR taps for the whole up_layers chain (baked as immediates) ---
    taps = _polyphase_taps(tuple(upsample_scales), pad, T=T)
    taps_static = tuple(tuple(float(v) for v in row) for row in taps)

    # --- time-tile sizing: keep the (double-buffered) output blocks inside a VMEM budget ---
    out_itemsize = np.dtype(out_dtype).itemsize
    row_align = 8 if out_itemsize >= 4 else 16              # sublane tiling for the out dtype
    if t_tile is None:
        out_bytes_per_row = 2 * (ts * F + ts * O) * out_itemsize   # 2-deep buffering
        budget = vmem_limit_bytes // 2
        t_tile = max(row_align,
                     min(256, (budget // max(out_bytes_per_row, 1)) // row_align * row_align))
    t_tile = min(t_tile, _round_up(T_out, row_align))
    t_tile = max(row_align, _round_up(t_tile, row_align))
    nT = -(-T_out // t_tile)
    T_pad = nT * t_tile + 2 * pad

    m_pad = m_btf.astype(jnp.float32)
    if T_pad > T:
        m_pad = jnp.pad(m_pad, ((0, 0), (0, T_pad - T), (0, 0)))

    # --- fold eval-mode BN affine into the matmul weights ---
    wc = (w_in * s_in[0]).reshape(ksize * F, C)              # conv_in, im2col layout
    w1f = w1 * s1[:, None, :]
    w2f = w2 * s2[:, None, :]
    rb_bias = jnp.stack([b1, b2], axis=1)                    # (R, 2, C) packed biases

    md = mxu_dtype
    args = (m_pad,
            wc.astype(md), b_in.astype(jnp.float32),
            w1f.astype(md), w2f.astype(md), rb_bias.astype(jnp.float32),
            w_out.astype(md), b_out.astype(jnp.float32))

    def full_spec(a):
        nd = a.ndim
        return pl.BlockSpec(a.shape, lambda b, t, _nd=nd: (0,) * _nd)

    kern = functools.partial(_upsample_network_kernel, ksize=ksize, res_blocks=R,
                             t_tile=t_tile, taps=taps_static, mxu_dtype=md)

    rows = B * nT * t_tile
    flops = rows * (2 * ksize * F * C + R * 4 * C * C + 2 * C * O + 2 * ts * ksize * F)
    bytes_accessed = (B * T_pad * F * 4
                      + (ksize * F * C + R * 2 * C * C + C * O) * 2
                      + rows * (ts * F + ts * O) * out_itemsize)

    mup_packed, aux_packed = pl.pallas_call(
        kern,
        out_shape=(jax.ShapeDtypeStruct((B, nT * t_tile, ts * F), out_dtype),
                   jax.ShapeDtypeStruct((B, nT * t_tile, ts * O), out_dtype)),
        grid=(B, nT),
        in_specs=[pl.BlockSpec((1, T_pad, F), lambda b, t: (b, 0, 0))]
                 + [full_spec(a) for a in args[1:]],
        out_specs=(pl.BlockSpec((1, t_tile, ts * F), lambda b, t: (b, t, 0)),
                   pl.BlockSpec((1, t_tile, ts * O), lambda b, t: (b, t, 0))),
        compiler_params=pltpu.CompilerParams(
            dimension_semantics=("parallel", "parallel"),
            vmem_limit_bytes=vmem_limit_bytes),
        cost_estimate=pl.CostEstimate(flops=int(flops), transcendentals=0,
                                      bytes_accessed=int(bytes_accessed)),
    )(*args)

    # Row-major contiguous reshapes (free) + crop of the time padding -> PyTorch layout.
    m_up = mup_packed.reshape(B, nT * t_tile * ts, F)[:, :L, :]
    aux = aux_packed.reshape(B, nT * t_tile * ts, O)[:, :L, :]
    return m_up, aux


# --------------------------- pure-JAX reference ----------------------------


def reference_forward(m_btf, params, *, upsample_scales, pad):
    (w_in, s_in, b_in, w1, s1, b1, w2, s2, b2, w_out, b_out) = params
    T = m_btf.shape[1]
    ksize = w_in.shape[0]
    T_out = T - (ksize - 1)
    total_scale = int(np.prod(upsample_scales))
    indent = pad * total_scale
    hp = jax.lax.Precision.HIGHEST

    h = sum(jnp.einsum('btf,fc->btc', m_btf[:, j:j + T_out, :], w_in[j], precision=hp)
            for j in range(ksize))
    h = jnp.maximum(h * s_in[0] + b_in[0], 0.0)
    for r in range(w1.shape[0]):
        y = jnp.maximum(jnp.einsum('btc,cd->btd', h, w1[r], precision=hp) * s1[r] + b1[r], 0.0)
        y = jnp.einsum('btc,cd->btd', y, w2[r], precision=hp) * s2[r] + b2[r]
        h = h + y
    aux = jnp.einsum('btc,co->bto', h, w_out, precision=hp) + b_out[0]
    aux = jnp.repeat(aux, total_scale, axis=1)

    x = m_btf
    for s in upsample_scales:
        x = jnp.repeat(x, s, axis=1)
        Wn = x.shape[1]
        xp = jnp.pad(x, ((0, 0), (s, s), (0, 0)))
        x = sum(xp[:, j:j + Wn, :] for j in range(2 * s + 1)) / (2 * s + 1)
    x = x[:, indent:-indent, :]
    return x, aux


# --------------------------------- main -------------------------------------


if __name__ == "__main__":
    # Small configuration consistent with UpsampleNetwork.__init__
    B, T = 2, 12
    feat_dims = 16          # in_dims of MelResNet
    compute_dims = 32
    res_out_dims = 16
    res_blocks = 2
    pad = 2
    upsample_scales = (2, 4)
    ksize = 2 * pad + 1

    key = jax.random.PRNGKey(0)
    ks = jax.random.split(key, 12)

    def bn_fold(kg, shape):
        # deterministic "trained" BN params, folded to (scale, shift), eval mode
        k1, k2, k3, k4 = jax.random.split(kg, 4)
        gamma = 1.0 + 0.1 * jax.random.normal(k1, shape, jnp.float32)
        beta = 0.1 * jax.random.normal(k2, shape, jnp.float32)
        mean = 0.1 * jax.random.normal(k3, shape, jnp.float32)
        var = 1.0 + 0.1 * jax.random.uniform(k4, shape, jnp.float32)
        scale = gamma / jnp.sqrt(var + 1e-5)
        shift = beta - mean * scale
        return scale, shift

    # conv_in: PyTorch weight (C_out, C_in, k) is stored here as (k, C_in, C_out)
    w_in = 0.1 * jax.random.normal(ks[0], (ksize, feat_dims, compute_dims), jnp.float32)
    s_in, b_in = bn_fold(ks[1], (1, compute_dims))
    w1 = 0.1 * jax.random.normal(ks[2], (res_blocks, compute_dims, compute_dims), jnp.float32)
    s1, b1 = bn_fold(ks[3], (res_blocks, compute_dims))
    w2 = 0.1 * jax.random.normal(ks[4], (res_blocks, compute_dims, compute_dims), jnp.float32)
    s2, b2 = bn_fold(ks[5], (res_blocks, compute_dims))
    w_out = 0.1 * jax.random.normal(ks[6], (compute_dims, res_out_dims), jnp.float32)
    b_out = 0.1 * jax.random.normal(ks[7], (1, res_out_dims), jnp.float32)
    params = (w_in, s_in, b_in, w1, s1, b1, w2, s2, b2, w_out, b_out)

    # mel input in (B, T, F) layout (PyTorch would pass (B, F, T); transpose is glue).
    m_btf = jax.random.normal(ks[8], (B, T, feat_dims), jnp.float32)

    m_up, aux = upsample_network_forward(m_btf, params,
                                         upsample_scales=upsample_scales, pad=pad)
    m_up, aux = jax.block_until_ready((m_up, aux))

    m_gold, aux_gold = reference_forward(m_btf, params,
                                         upsample_scales=upsample_scales, pad=pad)

    total_scale = int(np.prod(upsample_scales))
    L = (T - 2 * pad) * total_scale
    assert m_up.shape == (B, L, feat_dims), m_up.shape
    assert aux.shape == (B, L, res_out_dims), aux.shape
    # bf16 MXU inputs + bf16 outputs (f32 accumulate) vs a HIGHEST-precision f32 reference.
    m_up_f32 = np.asarray(m_up.astype(jnp.float32))
    aux_f32 = np.asarray(aux.astype(jnp.float32))
    np.testing.assert_allclose(m_up_f32, np.asarray(m_gold), rtol=3e-2, atol=3e-2)
    np.testing.assert_allclose(aux_f32, np.asarray(aux_gold), rtol=3e-2, atol=3e-2)

    print("KERNEL_OK")
</pallas_src>

<mosaic_0001>
module attributes {stable_mosaic.version = 11 : i64} {
  func.func @_upsample_network_kernel(%arg0: i32, %arg1: i32, %arg2: memref<1x20x16xf32, #tpu.memory_space<vmem>>, %arg3: memref<80x32xbf16, #tpu.memory_space<vmem>>, %arg4: memref<1x32xf32, #tpu.memory_space<vmem>>, %arg5: memref<2x32x32xbf16, #tpu.memory_space<vmem>>, %arg6: memref<2x32x32xbf16, #tpu.memory_space<vmem>>, %arg7: memref<2x2x32xf32, #tpu.memory_space<vmem>>, %arg8: memref<32x16xbf16, #tpu.memory_space<vmem>>, %arg9: memref<1x16xf32, #tpu.memory_space<vmem>>, %arg10: memref<1x16x128xbf16, #tpu.memory_space<vmem>>, %arg11: memref<1x16x128xbf16, #tpu.memory_space<vmem>>) attributes {dimension_semantics = [#tpu.dimension_semantics<parallel>, #tpu.dimension_semantics<parallel>], iteration_bounds = array<i64: 2, 1>, scalar_prefetch = 0 : i64, scratch_operands = 0 : i64, tpu.core_type = #tpu.core_type<tc>, window_params = [{transform_indices = @transform_0, window_bounds = array<i64: 1, 20, 16>}, {pipeline_mode = #tpu.pipeline_mode<synchronous>, transform_indices = @transform_1, window_bounds = array<i64: 80, 32>}, {pipeline_mode = #tpu.pipeline_mode<synchronous>, transform_indices = @transform_2, window_bounds = array<i64: 1, 32>}, {pipeline_mode = #tpu.pipeline_mode<synchronous>, transform_indices = @transform_3, window_bounds = array<i64: 2, 32, 32>}, {pipeline_mode = #tpu.pipeline_mode<synchronous>, transform_indices = @transform_4, window_bounds = array<i64: 2, 32, 32>}, {pipeline_mode = #tpu.pipeline_mode<synchronous>, transform_indices = @transform_5, window_bounds = array<i64: 2, 2, 32>}, {pipeline_mode = #tpu.pipeline_mode<synchronous>, transform_indices = @transform_6, window_bounds = array<i64: 32, 16>}, {pipeline_mode = #tpu.pipeline_mode<synchronous>, transform_indices = @transform_7, window_bounds = array<i64: 1, 16>}, {transform_indices = @transform_8, window_bounds = array<i64: 1, 16, 128>}, {transform_indices = @transform_9, window_bounds = array<i64: 1, 16, 128>}]} {
    %c16_i32 = arith.constant 16 : i32
    %0 = arith.muli %arg1, %c16_i32 : i32
    %1 = tpu.assume_multiple %0, 8 : i32
    %c0 = arith.constant 0 : index
    %2 = arith.index_cast %1 : i32 to index
    %c0_0 = arith.constant 0 : index
    %3 = vector.load %arg2[%c0, %2, %c0_0] : memref<1x20x16xf32, #tpu.memory_space<vmem>>, vector<1x20x16xf32>
    %4 = vector.shape_cast %3 : vector<1x20x16xf32> to vector<20x16xf32>
    %5 = vector.extract_strided_slice %4 {offsets = [0, 0], sizes = [16, 16], strides = [1, 1]} : vector<20x16xf32> to vector<16x16xf32>
    %6 = vector.extract_strided_slice %4 {offsets = [1, 0], sizes = [16, 16], strides = [1, 1]} : vector<20x16xf32> to vector<16x16xf32>
    %7 = vector.extract_strided_slice %4 {offsets = [2, 0], sizes = [16, 16], strides = [1, 1]} : vector<20x16xf32> to vector<16x16xf32>
    %8 = vector.extract_strided_slice %4 {offsets = [3, 0], sizes = [16, 16], strides = [1, 1]} : vector<20x16xf32> to vector<16x16xf32>
    %9 = vector.extract_strided_slice %4 {offsets = [4, 0], sizes = [16, 16], strides = [1, 1]} : vector<20x16xf32> to vector<16x16xf32>
    %10 = tpu.concatenate %5, %6, %7, %8, %9 in 1 : vector<16x16xf32>, vector<16x16xf32>, vector<16x16xf32>, vector<16x16xf32>, vector<16x16xf32> -> vector<16x80xf32>
    %11 = arith.truncf %10 : vector<16x80xf32> to vector<16x80xbf16>
    %c0_1 = arith.constant 0 : index
    %c0_2 = arith.constant 0 : index
    %12 = vector.load %arg3[%c0_1, %c0_2] : memref<80x32xbf16, #tpu.memory_space<vmem>>, vector<80x32xbf16>
    %cst = arith.constant dense<0.000000e+00> : vector<16x32xf32>
    %13 = tpu.matmul %11, %12, %cst {dimension_numbers = #tpu.dot_dimension_numbers<[1], [0], [0], [1], [0, 0, 1, 1], [], []>} : vector<16x80xbf16>, vector<80x32xbf16>, vector<16x32xf32> -> vector<16x32xf32>
    %c0_3 = arith.constant 0 : index
    %c0_4 = arith.constant 0 : index
    %14 = vector.load %arg4[%c0_3, %c0_4] : memref<1x32xf32, #tpu.memory_space<vmem>>, vector<1x32xf32>
    %15 = vector.broadcast %14 : vector<1x32xf32> to vector<16x32xf32>
    %16 = arith.addf %13, %15 : vector<16x32xf32>
    %cst_5 = arith.constant 0.000000e+00 : f32
    %17 = vector.broadcast %cst_5 : f32 to vector<16x32xf32>
    %18 = arith.maximumf %16, %17 : vector<16x32xf32>
    %c0_6 = arith.constant 0 : index
    %c0_7 = arith.constant 0 : index
    %c0_8 = arith.constant 0 : index
    %19 = vector.load %arg7[%c0_6, %c0_7, %c0_8] : memref<2x2x32xf32, #tpu.memory_space<vmem>>, vector<1x2x32xf32>
    %20 = vector.shape_cast %19 : vector<1x2x32xf32> to vector<2x32xf32>
    %21 = arith.truncf %18 : vector<16x32xf32> to vector<16x32xbf16>
    %c0_9 = arith.constant 0 : index
    %c0_10 = arith.constant 0 : index
    %c0_11 = arith.constant 0 : index
    %22 = vector.load %arg5[%c0_9, %c0_10, %c0_11] : memref<2x32x32xbf16, #tpu.memory_space<vmem>>, vector<1x32x32xbf16>
    %23 = vector.shape_cast %22 : vector<1x32x32xbf16> to vector<32x32xbf16>
    %cst_12 = arith.constant dense<0.000000e+00> : vector<16x32xf32>
    %24 = tpu.matmul %21, %23, %cst_12 {dimension_numbers = #tpu.dot_dimension_numbers<[1], [0], [0], [1], [0, 0, 1, 1], [], []>} : vector<16x32xbf16>, vector<32x32xbf16>, vector<16x32xf32> -> vector<16x32xf32>
    %25 = vector.extract_strided_slice %20 {offsets = [0, 0], sizes = [1, 32], strides = [1, 1]} : vector<2x32xf32> to vector<1x32xf32>
    %26 = vector.broadcast %25 : vector<1x32xf32> to vector<16x32xf32>
    %27 = arith.addf %24, %26 : vector<16x32xf32>
    %cst_13 = arith.constant 0.000000e+00 : f32
    %28 = vector.broadcast %cst_13 : f32 to vector<16x32xf32>
    %29 = arith.maximumf %27, %28 : vector<16x32xf32>
    %30 = arith.truncf %29 : vector<16x32xf32> to vector<16x32xbf16>
    %c0_14 = arith.constant 0 : index
    %c0_15 = arith.constant 0 : index
    %c0_16 = arith.constant 0 : index
    %31 = vector.load %arg6[%c0_14, %c0_15, %c0_16] : memref<2x32x32xbf16, #tpu.memory_space<vmem>>, vector<1x32x32xbf16>
    %32 = vector.shape_cast %31 : vector<1x32x32xbf16> to vector<32x32xbf16>
    %cst_17 = arith.constant dense<0.000000e+00> : vector<16x32xf32>
    %33 = tpu.matmul %30, %32, %cst_17 {dimension_numbers = #tpu.dot_dimension_numbers<[1], [0], [0], [1], [0, 0, 1, 1], [], []>} : vector<16x32xbf16>, vector<32x32xbf16>, vector<16x32xf32> -> vector<16x32xf32>
    %34 = arith.addf %18, %33 : vector<16x32xf32>
    %35 = vector.extract_strided_slice %20 {offsets = [1, 0], sizes = [1, 32], strides = [1, 1]} : vector<2x32xf32> to vector<1x32xf32>
    %36 = vector.broadcast %35 : vector<1x32xf32> to vector<16x32xf32>
    %37 = arith.addf %34, %36 : vector<16x32xf32>
    %c1 = arith.constant 1 : index
    %c0_18 = arith.constant 0 : index
    %c0_19 = arith.constant 0 : index
    %38 = vector.load %arg7[%c1, %c0_18, %c0_19] : memref<2x2x32xf32, #tpu.memory_space<vmem>>, vector<1x2x32xf32>
    %39 = vector.shape_cast %38 : vector<1x2x32xf32> to vector<2x32xf32>
    %40 = arith.truncf %37 : vector<16x32xf32> to vector<16x32xbf16>
    %c1_20 = arith.constant 1 : index
    %c0_21 = arith.constant 0 : index
    %c0_22 = arith.constant 0 : index
    %41 = vector.load %arg5[%c1_20, %c0_21, %c0_22] : memref<2x32x32xbf16, #tpu.memory_space<vmem>>, vector<1x32x32xbf16>
    %42 = vector.shape_cast %41 : vector<1x32x32xbf16> to vector<32x32xbf16>
    %cst_23 = arith.constant dense<0.000000e+00> : vector<16x32xf32>
    %43 = tpu.matmul %40, %42, %cst_23 {dimension_numbers = #tpu.dot_dimension_numbers<[1], [0], [0], [1], [0, 0, 1, 1], [], []>} : vector<16x32xbf16>, vector<32x32xbf16>, vector<16x32xf32> -> vector<16x32xf32>
    %44 = vector.extract_strided_slice %39 {offsets = [0, 0], sizes = [1, 32], strides = [1, 1]} : vector<2x32xf32> to vector<1x32xf32>
    %45 = vector.broadcast %44 : vector<1x32xf32> to vector<16x32xf32>
    %46 = arith.addf %43, %45 : vector<16x32xf32>
    %cst_24 = arith.constant 0.000000e+00 : f32
    %47 = vector.broadcast %cst_24 : f32 to vector<16x32xf32>
    %48 = arith.maximumf %46, %47 : vector<16x32xf32>
    %49 = arith.truncf %48 : vector<16x32xf32> to vector<16x32xbf16>
    %c1_25 = arith.constant 1 : index
    %c0_26 = arith.constant 0 : index
    %c0_27 = arith.constant 0 : index
    %50 = vector.load %arg6[%c1_25, %c0_26, %c0_27] : memref<2x32x32xbf16, #tpu.memory_space<vmem>>, vector<1x32x32xbf16>
    %51 = vector.shape_cast %50 : vector<1x32x32xbf16> to vector<32x32xbf16>
    %cst_28 = arith.constant dense<0.000000e+00> : vector<16x32xf32>
    %52 = tpu.matmul %49, %51, %cst_28 {dimension_numbers = #tpu.dot_dimension_numbers<[1], [0], [0], [1], [0, 0, 1, 1], [], []>} : vector<16x32xbf16>, vector<32x32xbf16>, vector<16x32xf32> -> vector<16x32xf32>
    %53 = arith.addf %37, %52 : vector<16x32xf32>
    %54 = vector.extract_strided_slice %39 {offsets = [1, 0], sizes = [1, 32], strides = [1, 1]} : vector<2x32xf32> to vector<1x32xf32>
    %55 = vector.broadcast %54 : vector<1x32xf32> to vector<16x32xf32>
    %56 = arith.addf %53, %55 : vector<16x32xf32>
    %57 = arith.truncf %56 : vector<16x32xf32> to vector<16x32xbf16>
    %c0_29 = arith.constant 0 : index
    %c0_30 = arith.constant 0 : index
    %58 = vector.load %arg8[%c0_29, %c0_30] : memref<32x16xbf16, #tpu.memory_space<vmem>>, vector<32x16xbf16>
    %cst_31 = arith.constant dense<0.000000e+00> : vector<16x16xf32>
    %59 = tpu.matmul %57, %58, %cst_31 {dimension_numbers = #tpu.dot_dimension_numbers<[1], [0], [0], [1], [0, 0, 1, 1], [], []>} : vector<16x32xbf16>, vector<32x16xbf16>, vector<16x16xf32> -> vector<16x16xf32>
    %c0_32 = arith.constant 0 : index
    %c0_33 = arith.constant 0 : index
    %60 = vector.load %arg9[%c0_32, %c0_33] : memref<1x16xf32, #tpu.memory_space<vmem>>, vector<1x16xf32>
    %61 = vector.broadcast %60 : vector<1x16xf32> to vector<16x16xf32>
    %62 = arith.addf %59, %61 : vector<16x16xf32>
    %63 = tpu.concatenate %62, %62, %62, %62, %62, %62, %62, %62 in 1 : vector<16x16xf32>, vector<16x16xf32>, vector<16x16xf32>, vector<16x16xf32>, vector<16x16xf32>, vector<16x16xf32>, vector<16x16xf32>, vector<16x16xf32> -> vector<16x128xf32>
    %64 = arith.truncf %63 : vector<16x128xf32> to vector<16x128xbf16>
    %c0_34 = arith.constant 0 : index
    %c0_35 = arith.constant 0 : index
    %c0_36 = arith.constant 0 : index
    %65 = vector.load %arg11[%c0_34, %c0_35, %c0_36] : memref<1x16x128xbf16, #tpu.memory_space<vmem>>, vector<1x16x128xbf16>
    %66 = vector.shape_cast %65 : vector<1x16x128xbf16> to vector<16x128xbf16>
    %67 = vector.shape_cast %64 : vector<16x128xbf16> to vector<1x16x128xbf16>
    tpu.vector_store %arg11[%c0_34, %c0_35, %c0_36], %67 {strides = array<i32>} : memref<1x16x128xbf16, #tpu.memory_space<vmem>>, vector<1x16x128xbf16>,
    %cst_37 = arith.constant 0.088888891 : f32
    %68 = vector.broadcast %cst_37 : f32 to vector<16x16xf32>
    %69 = arith.mulf %68, %5 : vector<16x16xf32>
    %cst_38 = arith.constant 0.377777785 : f32
    %70 = vector.broadcast %cst_38 : f32 to vector<16x16xf32>
    %71 = arith.mulf %70, %6 : vector<16x16xf32>
    %72 = arith.addf %69, %71 : vector<16x16xf32>
    %cst_39 = arith.constant 4.000000e-01 : f32
    %73 = vector.broadcast %cst_39 : f32 to vector<16x16xf32>
    %74 = arith.mulf %73, %7 : vector<16x16xf32>
    %75 = arith.addf %72, %74 : vector<16x16xf32>
    %cst_40 = arith.constant 0.13333334 : f32
    %76 = vector.broadcast %cst_40 : f32 to vector<16x16xf32>
    %77 = arith.mulf %76, %8 : vector<16x16xf32>
    %78 = arith.addf %75, %77 : vector<16x16xf32>
    %cst_41 = arith.constant 0.000000e+00 : f32
    %79 = vector.broadcast %cst_41 : f32 to vector<16x16xf32>
    %80 = arith.mulf %79, %9 : vector<16x16xf32>
    %81 = arith.addf %78, %80 : vector<16x16xf32>
    %cst_42 = arith.constant 0.0666666701 : f32
    %82 = vector.broadcast %cst_42 : f32 to vector<16x16xf32>
    %83 = arith.mulf %82, %5 : vector<16x16xf32>
    %cst_43 = arith.constant 0.355555564 : f32
    %84 = vector.broadcast %cst_43 : f32 to vector<16x16xf32>
    %85 = arith.mulf %84, %6 : vector<16x16xf32>
    %86 = arith.addf %83, %85 : vector<16x16xf32>
    %cst_44 = arith.constant 4.000000e-01 : f32
    %87 = vector.broadcast %cst_44 : f32 to vector<16x16xf32>
    %88 = arith.mulf %87, %7 : vector<16x16xf32>
    %89 = arith.addf %86, %88 : vector<16x16xf32>
    %cst_45 = arith.constant 0.177777782 : f32
    %90 = vector.broadcast %cst_45 : f32 to vector<16x16xf32>
    %91 = arith.mulf %90, %8 : vector<16x16xf32>
    %92 = arith.addf %89, %91 : vector<16x16xf32>
    %cst_46 = arith.constant 0.000000e+00 : f32
    %93 = vector.broadcast %cst_46 : f32 to vector<16x16xf32>
    %94 = arith.mulf %93, %9 : vector<16x16xf32>
    %95 = arith.addf %92, %94 : vector<16x16xf32>
    %cst_47 = arith.constant 0.0444444455 : f32
    %96 = vector.broadcast %cst_47 : f32 to vector<16x16xf32>
    %97 = arith.mulf %96, %5 : vector<16x16xf32>
    %cst_48 = arith.constant 0.333333343 : f32
    %98 = vector.broadcast %cst_48 : f32 to vector<16x16xf32>
    %99 = arith.mulf %98, %6 : vector<16x16xf32>
    %100 = arith.addf %97, %99 : vector<16x16xf32>
    %cst_49 = arith.constant 4.000000e-01 : f32
    %101 = vector.broadcast %cst_49 : f32 to vector<16x16xf32>
    %102 = arith.mulf %101, %7 : vector<16x16xf32>
    %103 = arith.addf %100, %102 : vector<16x16xf32>
    %cst_50 = arith.constant 0.222222224 : f32
    %104 = vector.broadcast %cst_50 : f32 to vector<16x16xf32>
    %105 = arith.mulf %104, %8 : vector<16x16xf32>
    %106 = arith.addf %103, %105 : vector<16x16xf32>
    %cst_51 = arith.constant 0.000000e+00 : f32
    %107 = vector.broadcast %cst_51 : f32 to vector<16x16xf32>
    %108 = arith.mulf %107, %9 : vector<16x16xf32>
    %109 = arith.addf %106, %108 : vector<16x16xf32>
    %cst_52 = arith.constant 0.0222222228 : f32
    %110 = vector.broadcast %cst_52 : f32 to vector<16x16xf32>
    %111 = arith.mulf %110, %5 : vector<16x16xf32>
    %cst_53 = arith.constant 0.311111122 : f32
    %112 = vector.broadcast %cst_53 : f32 to vector<16x16xf32>
    %113 = arith.mulf %112, %6 : vector<16x16xf32>
    %114 = arith.addf %111, %113 : vector<16x16xf32>
    %cst_54 = arith.constant 4.000000e-01 : f32
    %115 = vector.broadcast %cst_54 : f32 to vector<16x16xf32>
    %116 = arith.mulf %115, %7 : vector<16x16xf32>
    %117 = arith.addf %114, %116 : vector<16x16xf32>
    %cst_55 = arith.constant 0.266666681 : f32
    %118 = vector.broadcast %cst_55 : f32 to vector<16x16xf32>
    %119 = arith.mulf %118, %8 : vector<16x16xf32>
    %120 = arith.addf %117, %119 : vector<16x16xf32>
    %cst_56 = arith.constant 0.000000e+00 : f32
    %121 = vector.broadcast %cst_56 : f32 to vector<16x16xf32>
    %122 = arith.mulf %121, %9 : vector<16x16xf32>
    %123 = arith.addf %120, %122 : vector<16x16xf32>
    %cst_57 = arith.constant 0.000000e+00 : f32
    %124 = vector.broadcast %cst_57 : f32 to vector<16x16xf32>
    %125 = arith.mulf %124, %5 : vector<16x16xf32>
    %cst_58 = arith.constant 0.266666681 : f32
    %126 = vector.broadcast %cst_58 : f32 to vector<16x16xf32>
    %127 = arith.mulf %126, %6 : vector<16x16xf32>
    %128 = arith.addf %125, %127 : vector<16x16xf32>
    %cst_59 = arith.constant 4.000000e-01 : f32
    %129 = vector.broadcast %cst_59 : f32 to vector<16x16xf32>
    %130 = arith.mulf %129, %7 : vector<16x16xf32>
    %131 = arith.addf %128, %130 : vector<16x16xf32>
    %cst_60 = arith.constant 0.311111122 : f32
    %132 = vector.broadcast %cst_60 : f32 to vector<16x16xf32>
    %133 = arith.mulf %132, %8 : vector<16x16xf32>
    %134 = arith.addf %131, %133 : vector<16x16xf32>
    %cst_61 = arith.constant 0.0222222228 : f32
    %135 = vector.broadcast %cst_61 : f32 to vector<16x16xf32>
    %136 = arith.mulf %135, %9 : vector<16x16xf32>
    %137 = arith.addf %134, %136 : vector<16x16xf32>
    %cst_62 = arith.constant 0.000000e+00 : f32
    %138 = vector.broadcast %cst_62 : f32 to vector<16x16xf32>
    %139 = arith.mulf %138, %5 : vector<16x16xf32>
    %cst_63 = arith.constant 0.222222224 : f32
    %140 = vector.broadcast %cst_63 : f32 to vector<16x16xf32>
    %141 = arith.mulf %140, %6 : vector<16x16xf32>
    %142 = arith.addf %139, %141 : vector<16x16xf32>
    %cst_64 = arith.constant 4.000000e-01 : f32
    %143 = vector.broadcast %cst_64 : f32 to vector<16x16xf32>
    %144 = arith.mulf %143, %7 : vector<16x16xf32>
    %145 = arith.addf %142, %144 : vector<16x16xf32>
    %cst_65 = arith.constant 0.333333343 : f32
    %146 = vector.broadcast %cst_65 : f32 to vector<16x16xf32>
    %147 = arith.mulf %146, %8 : vector<16x16xf32>
    %148 = arith.addf %145, %147 : vector<16x16xf32>
    %cst_66 = arith.constant 0.0444444455 : f32
    %149 = vector.broadcast %cst_66 : f32 to vector<16x16xf32>
    %150 = arith.mulf %149, %9 : vector<16x16xf32>
    %151 = arith.addf %148, %150 : vector<16x16xf32>
    %cst_67 = arith.constant 0.000000e+00 : f32
    %152 = vector.broadcast %cst_67 : f32 to vector<16x16xf32>
    %153 = arith.mulf %152, %5 : vector<16x16xf32>
    %cst_68 = arith.constant 0.177777782 : f32
    %154 = vector.broadcast %cst_68 : f32 to vector<16x16xf32>
    %155 = arith.mulf %154, %6 : vector<16x16xf32>
    %156 = arith.addf %153, %155 : vector<16x16xf32>
    %cst_69 = arith.constant 4.000000e-01 : f32
    %157 = vector.broadcast %cst_69 : f32 to vector<16x16xf32>
    %158 = arith.mulf %157, %7 : vector<16x16xf32>
    %159 = arith.addf %156, %158 : vector<16x16xf32>
    %cst_70 = arith.constant 0.355555564 : f32
    %160 = vector.broadcast %cst_70 : f32 to vector<16x16xf32>
    %161 = arith.mulf %160, %8 : vector<16x16xf32>
    %162 = arith.addf %159, %161 : vector<16x16xf32>
    %cst_71 = arith.constant 0.0666666701 : f32
    %163 = vector.broadcast %cst_71 : f32 to vector<16x16xf32>
    %164 = arith.mulf %163, %9 : vector<16x16xf32>
    %165 = arith.addf %162, %164 : vector<16x16xf32>
    %cst_72 = arith.constant 0.000000e+00 : f32
    %166 = vector.broadcast %cst_72 : f32 to vector<16x16xf32>
    %167 = arith.mulf %166, %5 : vector<16x16xf32>
    %cst_73 = arith.constant 0.13333334 : f32
    %168 = vector.broadcast %cst_73 : f32 to vector<16x16xf32>
    %169 = arith.mulf %168, %6 : vector<16x16xf32>
    %170 = arith.addf %167, %169 : vector<16x16xf32>
    %cst_74 = arith.constant 4.000000e-01 : f32
    %171 = vector.broadcast %cst_74 : f32 to vector<16x16xf32>
    %172 = arith.mulf %171, %7 : vector<16x16xf32>
    %173 = arith.addf %170, %172 : vector<16x16xf32>
    %cst_75 = arith.constant 0.377777785 : f32
    %174 = vector.broadcast %cst_75 : f32 to vector<16x16xf32>
    %175 = arith.mulf %174, %8 : vector<16x16xf32>
    %176 = arith.addf %173, %175 : vector<16x16xf32>
    %cst_76 = arith.constant 0.088888891 : f32
    %177 = vector.broadcast %cst_76 : f32 to vector<16x16xf32>
    %178 = arith.mulf %177, %9 : vector<16x16xf32>
    %179 = arith.addf %176, %178 : vector<16x16xf32>
    %180 = tpu.concatenate %81, %95, %109, %123, %137, %151, %165, %179 in 1 : vector<16x16xf32>, vector<16x16xf32>, vector<16x16xf32>, vector<16x16xf32>, vector<16x16xf32>, vector<16x16xf32>, vector<16x16xf32>, vector<16x16xf32> -> vector<16x128xf32>
    %181 = arith.truncf %180 : vector<16x128xf32> to vector<16x128xbf16>
    %c0_77 = arith.constant 0 : index
    %c0_78 = arith.constant 0 : index
    %c0_79 = arith.constant 0 : index
    %182 = vector.load %arg10[%c0_77, %c0_78, %c0_79] : memref<1x16x128xbf16, #tpu.memory_space<vmem>>, vector<1x16x128xbf16>
    %183 = vector.shape_cast %182 : vector<1x16x128xbf16> to vector<16x128xbf16>
    %184 = vector.shape_cast %181 : vector<16x128xbf16> to vector<1x16x128xbf16>
    tpu.vector_store %arg10[%c0_77, %c0_78, %c0_79], %184 {strides = array<i32>} : memref<1x16x128xbf16, #tpu.memory_space<vmem>>, vector<1x16x128xbf16>,
    return
  }
  func.func @transform_0(%arg0: i32, %arg1: i32) -> (i32, i32, i32) {
    %c0_i32 = arith.constant 0 : i32
    %c0_i32_0 = arith.constant 0 : i32
    %c0_i32_1 = arith.constant 0 : i32
    return %arg0, %c0_i32, %c0_i32_0 : i32, i32, i32
  }
  func.func @transform_1(%arg0: i32, %arg1: i32) -> (i32, i32) {
    %c0_i32 = arith.constant 0 : i32
    %c0_i32_0 = arith.constant 0 : i32
    %c0_i32_1 = arith.constant 0 : i32
    return %c0_i32, %c0_i32_0 : i32, i32
  }
  func.func @transform_2(%arg0: i32, %arg1: i32) -> (i32, i32) {
    %c0_i32 = arith.constant 0 : i32
    %c0_i32_0 = arith.constant 0 : i32
    %c0_i32_1 = arith.constant 0 : i32
    return %c0_i32, %c0_i32_0 : i32, i32
  }
  func.func @transform_3(%arg0: i32, %arg1: i32) -> (i32, i32, i32) {
    %c0_i32 = arith.constant 0 : i32
    %c0_i32_0 = arith.constant 0 : i32
    %c0_i32_1 = arith.constant 0 : i32
    %c0_i32_2 = arith.constant 0 : i32
    return %c0_i32, %c0_i32_0, %c0_i32_1 : i32, i32, i32
  }
  func.func @transform_4(%arg0: i32, %arg1: i32) -> (i32, i32, i32) {
    %c0_i32 = arith.constant 0 : i32
    %c0_i32_0 = arith.constant 0 : i32
    %c0_i32_1 = arith.constant 0 : i32
    %c0_i32_2 = arith.constant 0 : i32
    return %c0_i32, %c0_i32_0, %c0_i32_1 : i32, i32, i32
  }
  func.func @transform_5(%arg0: i32, %arg1: i32) -> (i32, i32, i32) {
    %c0_i32 = arith.constant 0 : i32
    %c0_i32_0 = arith.constant 0 : i32
    %c0_i32_1 = arith.constant 0 : i32
    %c0_i32_2 = arith.constant 0 : i32
    return %c0_i32, %c0_i32_0, %c0_i32_1 : i32, i32, i32
  }
  func.func @transform_6(%arg0: i32, %arg1: i32) -> (i32, i32) {
    %c0_i32 = arith.constant 0 : i32
    %c0_i32_0 = arith.constant 0 : i32
    %c0_i32_1 = arith.constant 0 : i32
    return %c0_i32, %c0_i32_0 : i32, i32
  }
  func.func @transform_7(%arg0: i32, %arg1: i32) -> (i32, i32) {
    %c0_i32 = arith.constant 0 : i32
    %c0_i32_0 = arith.constant 0 : i32
    %c0_i32_1 = arith.constant 0 : i32
    return %c0_i32, %c0_i32_0 : i32, i32
  }
  func.func @transform_8(%arg0: i32, %arg1: i32) -> (i32, i32, i32) {
    %c0_i32 = arith.constant 0 : i32
    %c0_i32_0 = arith.constant 0 : i32
    return %arg0, %arg1, %c0_i32 : i32, i32, i32
  }
  func.func @transform_9(%arg0: i32, %arg1: i32) -> (i32, i32, i32) {
    %c0_i32 = arith.constant 0 : i32
    %c0_i32_0 = arith.constant 0 : i32
    return %arg0, %arg1, %c0_i32 : i32, i32, i32
  }
}

</mosaic_0001>

<llo_original>
// kernel: tpu_custom_call.1
$region0: #{tpu_custom_call.1}
  #allocation0 [shape = 'u32[]', space=smem, size = 0x4, offset = 0x4, fixed_abs, tag = 'smem constant byte address 0x4 - core index']
  #allocation1 [shape = 'u32[144,128]{1,0:T(1,128)}', space=vmem, size = 0x12000, scoped, tag = 'internal scratch']
  %s0 = inlined_call_operand.vmem [shape: f32[2,20,16], index: 0, kind: input, shape index: {}]
  %s1 = inlined_call_operand.vmem [shape: bf16[80,32], index: 1, kind: input, shape index: {}]
  %s2 = inlined_call_operand.vmem [shape: f32[1,32], index: 2, kind: input, shape index: {}]
  %s3 = inlined_call_operand.vmem [shape: bf16[2,32,32], index: 3, kind: input, shape index: {}]
  %s4 = inlined_call_operand.vmem [shape: bf16[2,32,32], index: 4, kind: input, shape index: {}]
  %s5 = inlined_call_operand.vmem [shape: f32[2,2,32], index: 5, kind: input, shape index: {}]
  %s6 = inlined_call_operand.vmem [shape: bf16[32,16], index: 6, kind: input, shape index: {}]
  %s7 = inlined_call_operand.vmem [shape: f32[1,16], index: 7, kind: input, shape index: {}]
  %s8 = inlined_call_operand.hbm [shape: bf16[2,16,128], index: 8, kind: output, shape index: {0}]
  %s9 = inlined_call_operand.hbm [shape: bf16[2,16,128], index: 9, kind: output, shape index: {1}]
  %10 = xla_tuple %s8, %s9
  %s11 = sld [smem:[#allocation0]]
  $region73: #{tpu_custom_call.1} parent=0
    _
  %s13 = ssub.s32 1, %s11
  %s14 = scalar_select 0, %s13, %s11
  $region1: #{tpu_custom_call.1} parent=0
    #allocation2 [shape = 'u8[8192]{0}', space=vmem, size = 0x2000, scoped, tag = 'output window, operand 0']
    #allocation3 [shape = 's32[2]{0}', space=sflag, size = 0x8, scoped, tag = 'scoped memory for tpu_custom_call.1']
    #allocation4 [shape = 'u8[8192]{0}', space=vmem, size = 0x2000, scoped, tag = 'output window, operand 1']
    #allocation5 [shape = 's32[2]{0}', space=sflag, size = 0x8, scoped, tag = 'scoped memory for tpu_custom_call.1']
    %15 = vsyncpa [#allocation3], 0
    %s16 = scalar_lea.sflag [#allocation3], 1
    %17 = vsyncpa %s16, 0
    %18 = vsyncpa [#allocation5], 0
    %s19 = scalar_lea.sflag [#allocation5], 1
    %20 = vsyncpa %s19, 0
    loop: start=0, step=1, limit=4
    $region2: #{tpu_custom_call.1} parent=1 // loop_pre_header
      _
    $region3: #{tpu_custom_call.1} parent=1 // loop_header
      %s22 = sphi 0, %s26
      %p23 = scmp.ge.s32.totalorder %s22, 4
      %s29 = sphi 0, %s41
      %s30 = sphi 0, %s37
      %s31 = sphi 0, %s29
      %s32 = sphi 0, %s30
      %s33 = sphi 0, %s31
      %s34 = sphi 0, %s32
      %s44 = sphi 0, %s46
      %s47 = sphi 0, %s44
      %s48 = sphi 0, %s47
      %s64 = sphi 0, %s48
      %s68 = sphi 0, %s68
      %s70 = sphi 0, %s68
      %s71 = sphi 0, %s70
      %s85 = sphi 0, %s71
      %s89 = sphi 0, %s89
      %s91 = sphi 0, %s89
      %s92 = sphi 0, %s91
      %s106 = sphi 0, %s92
      %s110 = sphi 0, %s110
      %s112 = sphi 0, %s110
      %s113 = sphi 0, %s112
      %s127 = sphi 0, %s113
      %s131 = sphi 0, %s131
      %s133 = sphi 0, %s131
      %s134 = sphi 0, %s133
      %s148 = sphi 0, %s134
      %s152 = sphi 0, %s152
      %s154 = sphi 0, %s152
      %s155 = sphi 0, %s154
      %s169 = sphi 0, %s155
      %s173 = sphi 0, %s173
      %s175 = sphi 0, %s173
      %s176 = sphi 0, %s175
      %s190 = sphi 0, %s176
      %s194 = sphi 0, %s194
      %s196 = sphi 0, %s194
      %s197 = sphi 0, %s196
      %s211 = sphi 0, %s197
      %s219 = sphi 0, %s221
      %s222 = sphi 0, %s219
      %s223 = sphi 0, %s222
      %s239 = sphi 0, %s223
      %s247 = sphi 0, %s249
      %s250 = sphi 0, %s247
      %s251 = sphi 0, %s250
      %s267 = sphi 0, %s251
    $region4: #{tpu_custom_call.1} parent=1 // loop_header_branch
      %25 = sbr.rel (%p23) target = $region8
    $region5: #{tpu_custom_call.1} parent=1 // loop_body
      %s27 = ssub.s32 %s22, 1
      %s28 = ssub.s32 %s22, 2
      %s35 = sadd.s32 1, %s30
      %p36 = scmp.ge.s32.totalorder %s35, 1
      %s37 = scalar_select %p36, 0, %s35
      %s38 = sadd.s32 1, %s29
      %s39 = scalar_select %p36, %s38, %s29
      %p40 = scmp.ge.s32.totalorder %s39, 2
      %s41 = scalar_select %p40, 0, %s39
      %s42 = ssub.s32 %s29, %s41
      %p43 = scmp.eq.s32.totalorder %s42, 0
      %s45 = sadd.s32 %s44, 1
      %s46 = scalar_select %p43, %s44, %s45
      %p49 = pneg %p43
      %p50 = scmp.eq.s32.totalorder %s22, 1
      %p51 = por %p49, %p50
      %p52 = scmp.ne.s32.totalorder %s44, %s47
      %p53 = scmp.eq.s32.totalorder %s22, 0
      %p54 = por %p52, %p53
      %p55 = scmp.ne.s32.totalorder %s44, %s47
      %p56 = scmp.eq.s32.totalorder %s27, 1
      %p57 = por %p55, %p56
      %p58 = scmp.ne.s32.totalorder %s47, %s48
      %p59 = scmp.eq.s32.totalorder %s27, 0
      %p60 = por %p58, %p59
      %p61 = scmp.ne.s32.totalorder %s47, %s48
      %p62 = scmp.eq.s32.totalorder %s28, 1
      %p63 = por %p61, %p62
      %p65 = scmp.ne.s32.totalorder %s48, %s64
      %p66 = scmp.eq.s32.totalorder %s28, 0
      %p67 = por %p65, %p66
      %s69 = sadd.s32 %s68, 1
      %p72 = scmp.eq.s32.totalorder %s22, 1
      %p73 = scmp.ne.s32.totalorder %s68, %s70
      %p74 = scmp.eq.s32.totalorder %s22, 0
      %p75 = por %p73, %p74
      %p76 = scmp.ne.s32.totalorder %s68, %s70
      %p77 = scmp.eq.s32.totalorder %s27, 1
      %p78 = por %p76, %p77
      %p79 = scmp.ne.s32.totalorder %s70, %s71
      %p80 = scmp.eq.s32.totalorder %s27, 0
      %p81 = por %p79, %p80
      %p82 = scmp.ne.s32.totalorder %s70, %s71
      %p83 = scmp.eq.s32.totalorder %s28, 1
      %p84 = por %p82, %p83
      %p86 = scmp.ne.s32.totalorder %s71, %s85
      %p87 = scmp.eq.s32.totalorder %s28, 0
      %p88 = por %p86, %p87
      %s90 = sadd.s32 %s89, 1
      %p93 = scmp.eq.s32.totalorder %s22, 1
      %p94 = scmp.ne.s32.totalorder %s89, %s91
      %p95 = scmp.eq.s32.totalorder %s22, 0
      %p96 = por %p94, %p95
      %p97 = scmp.ne.s32.totalorder %s89, %s91
      %p98 = scmp.eq.s32.totalorder %s27, 1
      %p99 = por %p97, %p98
      %p100 = scmp.ne.s32.totalorder %s91, %s92
      %p101 = scmp.eq.s32.totalorder %s27, 0
      %p102 = por %p100, %p101
      %p103 = scmp.ne.s32.totalorder %s91, %s92
      %p104 = scmp.eq.s32.totalorder %s28, 1
      %p105 = por %p103, %p104
      %p107 = scmp.ne.s32.totalorder %s92, %s106
      %p108 = scmp.eq.s32.totalorder %s28, 0
      %p109 = por %p107, %p108
      %s111 = sadd.s32 %s110, 1
      %p114 = scmp.eq.s32.totalorder %s22, 1
      %p115 = scmp.ne.s32.totalorder %s110, %s112
      %p116 = scmp.eq.s32.totalorder %s22, 0
      %p117 = por %p115, %p116
      %p118 = scmp.ne.s32.totalorder %s110, %s112
      %p119 = scmp.eq.s32.totalorder %s27, 1
      %p120 = por %p118, %p119
      %p121 = scmp.ne.s32.totalorder %s112, %s113
      %p122 = scmp.eq.s32.totalorder %s27, 0
      %p123 = por %p121, %p122
      %p124 = scmp.ne.s32.totalorder %s112, %s113
      %p125 = scmp.eq.s32.totalorder %s28, 1
      %p126 = por %p124, %p125
      %p128 = scmp.ne.s32.totalorder %s113, %s127
      %p129 = scmp.eq.s32.totalorder %s28, 0
      %p130 = por %p128, %p129
      %s132 = sadd.s32 %s131, 1
      %p135 = scmp.eq.s32.totalorder %s22, 1
      %p136 = scmp.ne.s32.totalorder %s131, %s133
      %p137 = scmp.eq.s32.totalorder %s22, 0
      %p138 = por %p136, %p137
      %p139 = scmp.ne.s32.totalorder %s131, %s133
      %p140 = scmp.eq.s32.totalorder %s27, 1
      %p141 = por %p139, %p140
      %p142 = scmp.ne.s32.totalorder %s133, %s134
      %p143 = scmp.eq.s32.totalorder %s27, 0
      %p144 = por %p142, %p143
      %p145 = scmp.ne.s32.totalorder %s133, %s134
      %p146 = scmp.eq.s32.totalorder %s28, 1
      %p147 = por %p145, %p146
      %p149 = scmp.ne.s32.totalorder %s134, %s148
      %p150 = scmp.eq.s32.totalorder %s28, 0
      %p151 = por %p149, %p150
      %s153 = sadd.s32 %s152, 1
      %p156 = scmp.eq.s32.totalorder %s22, 1
      %p157 = scmp.ne.s32.totalorder %s152, %s154
      %p158 = scmp.eq.s32.totalorder %s22, 0
      %p159 = por %p157, %p158
      %p160 = scmp.ne.s32.totalorder %s152, %s154
      %p161 = scmp.eq.s32.totalorder %s27, 1
      %p162 = por %p160, %p161
      %p163 = scmp.ne.s32.totalorder %s154, %s155
      %p164 = scmp.eq.s32.totalorder %s27, 0
      %p165 = por %p163, %p164
      %p166 = scmp.ne.s32.totalorder %s154, %s155
      %p167 = scmp.eq.s32.totalorder %s28, 1
      %p168 = por %p166, %p167
      %p170 = scmp.ne.s32.totalorder %s155, %s169
      %p171 = scmp.eq.s32.totalorder %s28, 0
      %p172 = por %p170, %p171
      %s174 = sadd.s32 %s173, 1
      %p177 = scmp.eq.s32.totalorder %s22, 1
      %p178 = scmp.ne.s32.totalorder %s173, %s175
      %p179 = scmp.eq.s32.totalorder %s22, 0
      %p180 = por %p178, %p179
      %p181 = scmp.ne.s32.totalorder %s173, %s175
      %p182 = scmp.eq.s32.totalorder %s27, 1
      %p183 = por %p181, %p182
      %p184 = scmp.ne.s32.totalorder %s175, %s176
      %p185 = scmp.eq.s32.totalorder %s27, 0
      %p186 = por %p184, %p185
      %p187 = scmp.ne.s32.totalorder %s175, %s176
      %p188 = scmp.eq.s32.totalorder %s28, 1
      %p189 = por %p187, %p188
      %p191 = scmp.ne.s32.totalorder %s176, %s190
      %p192 = scmp.eq.s32.totalorder %s28, 0
      %p193 = por %p191, %p192
      %s195 = sadd.s32 %s194, 1
      %p198 = scmp.eq.s32.totalorder %s22, 1
      %p199 = scmp.ne.s32.totalorder %s194, %s196
      %p200 = scmp.eq.s32.totalorder %s22, 0
      %p201 = por %p199, %p200
      %p202 = scmp.ne.s32.totalorder %s194, %s196
      %p203 = scmp.eq.s32.totalorder %s27, 1
      %p204 = por %p202, %p203
      %p205 = scmp.ne.s32.totalorder %s196, %s197
      %p206 = scmp.eq.s32.totalorder %s27, 0
      %p207 = por %p205, %p206
      %p208 = scmp.ne.s32.totalorder %s196, %s197
      %p209 = scmp.eq.s32.totalorder %s28, 1
      %p210 = por %p208, %p209
      %p212 = scmp.ne.s32.totalorder %s197, %s211
      %p213 = scmp.eq.s32.totalorder %s28, 0
      %p214 = por %p212, %p213
      %s215 = ssub.s32 %s29, %s41
      %s216 = ssub.s32 %s30, %s37
      %s217 = sor.u32 %s215, %s216
      %p218 = scmp.eq.s32.totalorder %s217, 0
      %s220 = sadd.s32 %s219, 1
      %s221 = scalar_select %p218, %s219, %s220
      %p224 = pneg %p218
      %p225 = scmp.eq.s32.totalorder %s22, 1
      %p226 = por %p224, %p225
      %p227 = scmp.ne.s32.totalorder %s219, %s222
      %p228 = scmp.eq.s32.totalorder %s22, 0
      %p229 = por %p227, %p228
      %p230 = scmp.ne.s32.totalorder %s219, %s222
      %p231 = scmp.eq.s32.totalorder %s27, 1
      %p232 = por %p230, %p231
      %p233 = scmp.ne.s32.totalorder %s222, %s223
      %p234 = scmp.eq.s32.totalorder %s27, 0
      %p235 = por %p233, %p234
      %p236 = scmp.ne.s32.totalorder %s222, %s223
      %p237 = scmp.eq.s32.totalorder %s28, 1
      %p238 = por %p236, %p237
      %p240 = scmp.ne.s32.totalorder %s223, %s239
      %p241 = scmp.eq.s32.totalorder %s28, 0
      %p242 = por %p240, %p241
      %s243 = ssub.s32 %s29, %s41
      %s244 = ssub.s32 %s30, %s37
      %s245 = sor.u32 %s243, %s244
      %p246 = scmp.eq.s32.totalorder %s245, 0
      %s248 = sadd.s32 %s247, 1
      %s249 = scalar_select %p246, %s247, %s248
      %p252 = pneg %p246
      %p253 = scmp.eq.s32.totalorder %s22, 1
      %p254 = por %p252, %p253
      %p255 = scmp.ne.s32.totalorder %s247, %s250
      %p256 = scmp.eq.s32.totalorder %s22, 0
      %p257 = por %p255, %p256
      %p258 = scmp.ne.s32.totalorder %s247, %s250
      %p259 = scmp.eq.s32.totalorder %s27, 1
      %p260 = por %p258, %p259
      %p261 = scmp.ne.s32.totalorder %s250, %s251
      %p262 = scmp.eq.s32.totalorder %s27, 0
      %p263 = por %p261, %p262
      %p264 = scmp.ne.s32.totalorder %s250, %s251
      %p265 = scmp.eq.s32.totalorder %s28, 1
      %p266 = por %p264, %p265
      %p268 = scmp.ne.s32.totalorder %s251, %s267
      %p269 = scmp.eq.s32.totalorder %s28, 0
      %p270 = por %p268, %p269
      %p271 = scmp.le.s32.totalorder 1, %s22
      %p272 = scmp.lt.s32.totalorder %s22, 3
      %p273 = pnand %p271, %p272
      %p274 = pneg %p273
      // Predicated region
      $region9: #{tpu_custom_call.1} parent=5 // pred_check
        _
      $region10: #{tpu_custom_call.1} parent=5 // pred_check_branch
        %276 = sbr.rel (%p273) target = $region12
      $region11: #{tpu_custom_call.1} parent=5 // pred_region
        %s277 = ssub.s32 %s22, 1
        // Predicated region
        $region13: #{tpu_custom_call.1} parent=11 // pred_check
          %p278 = pneg %p81
        $region14: #{tpu_custom_call.1} parent=11 // pred_check_branch
          %280 = sbr.rel (%p278) target = $region16
        $region15: #{tpu_custom_call.1} parent=11 // pred_region
          _
        $region16: #{tpu_custom_call.1} parent=11 // pred_fallthru
          _
        // Predicated region
        $region17: #{tpu_custom_call.1} parent=11 // pred_check
          %p281 = pneg %p102
        $region18: #{tpu_custom_call.1} parent=11 // pred_check_branch
          %283 = sbr.rel (%p281) target = $region20
        $region19: #{tpu_custom_call.1} parent=11 // pred_region
          _
        $region20: #{tpu_custom_call.1} parent=11 // pred_fallthru
          _
        // Predicated region
        $region21: #{tpu_custom_call.1} parent=11 // pred_check
          %p284 = pneg %p123
        $region22: #{tpu_custom_call.1} parent=11 // pred_check_branch
          %286 = sbr.rel (%p284) target = $region24
        $region23: #{tpu_custom_call.1} parent=11 // pred_region
          _
        $region24: #{tpu_custom_call.1} parent=11 // pred_fallthru
          _
        // Predicated region
        $region25: #{tpu_custom_call.1} parent=11 // pred_check
          %p287 = pneg %p144
        $region26: #{tpu_custom_call.1} parent=11 // pred_check_branch
          %289 = sbr.rel (%p287) target = $region28
        $region27: #{tpu_custom_call.1} parent=11 // pred_region
          _
        $region28: #{tpu_custom_call.1} parent=11 // pred_fallthru
          _
        // Predicated region
        $region29: #{tpu_custom_call.1} parent=11 // pred_check
          %p290 = pneg %p165
        $region30: #{tpu_custom_call.1} parent=11 // pred_check_branch
          %292 = sbr.rel (%p290) target = $region32
        $region31: #{tpu_custom_call.1} parent=11 // pred_region
          _
        $region32: #{tpu_custom_call.1} parent=11 // pred_fallthru
          _
        // Predicated region
        $region33: #{tpu_custom_call.1} parent=11 // pred_check
          %p293 = pneg %p186
        $region34: #{tpu_custom_call.1} parent=11 // pred_check_branch
          %295 = sbr.rel (%p293) target = $region36
        $region35: #{tpu_custom_call.1} parent=11 // pred_region
          _
        $region36: #{tpu_custom_call.1} parent=11 // pred_fallthru
          _
        // Predicated region
        $region37: #{tpu_custom_call.1} parent=11 // pred_check
          %p296 = pneg %p207
        $region38: #{tpu_custom_call.1} parent=11 // pred_check_branch
          %298 = sbr.rel (%p296) target = $region40
        $region39: #{tpu_custom_call.1} parent=11 // pred_region
          _
        $region40: #{tpu_custom_call.1} parent=11 // pred_fallthru
          _
      $region12: #{tpu_custom_call.1} parent=5 // pred_fallthru
        _
      %p299 = scmp.lt.s32.totalorder %s22, 2
      // Predicated region
      $region41: #{tpu_custom_call.1} parent=5 // pred_check
        %p300 = pneg %p299
      $region42: #{tpu_custom_call.1} parent=5 // pred_check_branch
        %302 = sbr.rel (%p300) target = $region44
      $region43: #{tpu_custom_call.1} parent=5 // pred_region
        // Predicated region
        $region45: #{tpu_custom_call.1} parent=43 // pred_check
          %p303 = pneg %p54
        $region46: #{tpu_custom_call.1} parent=43 // pred_check_branch
          %305 = sbr.rel (%p303) target = $region48
        $region47: #{tpu_custom_call.1} parent=43 // pred_region
          %p306 = scmp.lt.s32.totalorder %s29, 1
          %s307 = scalar_select %p306, %s29, 1
          %s308 = smul.addr %s307, 3
          %s309 = smul.addr %s308, 8
          %s310 = scalar_lea.vmem %s0, %s309
        $region48: #{tpu_custom_call.1} parent=43 // pred_fallthru
          _
      $region44: #{tpu_custom_call.1} parent=5 // pred_fallthru
        _
      %p311 = scmp.le.s32.totalorder 1, %s22
      %p312 = scmp.lt.s32.totalorder %s22, 3
      %p313 = pnand %p311, %p312
      %p314 = pneg %p313
      // Predicated region
      $region49: #{tpu_custom_call.1} parent=5 // pred_check
        _
      $region50: #{tpu_custom_call.1} parent=5 // pred_check_branch
        %316 = sbr.rel (%p313) target = $region52
      $region51: #{tpu_custom_call.1} parent=5 // pred_region
        %s317 = ssub.s32 %s22, 1
        %p318 = scmp.lt.s32.totalorder %s31, 1
        %s319 = scalar_select %p318, %s31, 1
        %s320 = smul.addr %s319, 3
        %s321 = smul.addr %s320, 8
        %s322 = scalar_lea.vmem %s0, %s321
        %p323 = pneg %p60
        %p324 = pneg %p57
        %p325 = pneg %p81
        %p326 = pneg %p78
        %p327 = pneg %p102
        %p328 = pneg %p99
        %p329 = pneg %p123
        %p330 = pneg %p120
        %p331 = pneg %p144
        %p332 = pneg %p141
        %p333 = pneg %p165
        %p334 = pneg %p162
        %p335 = pneg %p186
        %p336 = pneg %p183
        %p337 = pneg %p207
        %p338 = pneg %p204
        %p339 = pneg %p235
        %p340 = pneg %p232
        %s341 = sand.u32 %s222, 1
        %s342 = scalar_lea.sflag [#allocation3], %s341
        %s343 = sand.u32 %s222, 1
        %s344 = smul.addr %s343, 8
        %s345 = scalar_lea.vmem [#allocation2], %s344
        %p346 = pneg %p263
        %p347 = pneg %p260
        %s348 = sand.u32 %s250, 1
        %s349 = scalar_lea.sflag [#allocation5], %s348
        %s350 = sand.u32 %s250, 1
        %s351 = smul.addr %s350, 8
        %s352 = scalar_lea.vmem [#allocation4], %s351
        %p353 = scmp.lt.s32.totalorder %s31, 1
        %s354 = scalar_select %p353, %s31, 1
        %s355 = smul.addr %s354, 3
        %s356 = smul.addr %s355, 8
        %s357 = scalar_lea.vmem %s0, %s356
        %s358 = smul.u32 2, %s32
        %s359 = smul.u32 2, %s32
        %s361 = smul.u32 %s32, 16
        %s362 = scalar_lea.vmem %s357, %s361
        %v363 = vld [vmem:[%s362] sm:$0xff]
        %v364 = vld [vmem:[%s362 + $0x8] sm:$0xff]
        %v365 = vld [vmem:[%s362 + $0x10] sm:$0xf]
        %vm369 = vcmask 1046528
        %v370 = vrot.slane %v363, 1
        %v371 = vrot.slane %v364, 1
        %v372 = vsel %vm369, %v370, %v371
        %v373 = vrot.slane %v365, 1
        %v374 = vsel %vm369, %v371, %v373
        %375 = vrot.lane.b32.xlu0 %v372, 16
        %v376 = vpop.permute.xlu0 %375
        %377 = vrot.lane.b32.xlu0 %v374, 16
        %v378 = vpop.permute.xlu0 %377
        %vm381 = vcmask 1045504
        %v382 = vrot.slane %v363, 2
        %v383 = vrot.slane %v364, 2
        %v384 = vsel %vm381, %v382, %v383
        %v385 = vrot.slane %v365, 2
        %v386 = vsel %vm381, %v383, %v385
        %387 = vrot.lane.b32.xlu0 %v384, 32
        %v388 = vpop.permute.xlu0 %387
        %389 = vrot.lane.b32.xlu0 %v386, 32
        %v390 = vpop.permute.xlu0 %389
        %vm393 = vcmask 1044480
        %v394 = vrot.slane %v363, 3
        %v395 = vrot.slane %v364, 3
        %v396 = vsel %vm393, %v394, %v395
        %v397 = vrot.slane %v365, 3
        %v398 = vsel %vm393, %v395, %v397
        %399 = vrot.lane.b32.xlu0 %v396, 48
        %v400 = vpop.permute.xlu0 %399
        %401 = vrot.lane.b32.xlu0 %v398, 48
        %v402 = vpop.permute.xlu0 %401
        %vm405 = vcmask 1043456
        %v406 = vrot.slane %v363, 4
        %v407 = vrot.slane %v364, 4
        %v408 = vsel %vm405, %v406, %v407
        %v409 = vrot.slane %v365, 4
        %v410 = vsel %vm405, %v407, %v409
        %411 = vrot.lane.b32.xlu0 %v408, 64
        %v412 = vpop.permute.xlu0 %411
        %413 = vrot.lane.b32.xlu0 %v410, 64
        %v414 = vpop.permute.xlu0 %413
        %vm417 = vcmask 130048
        %v418 = vsel %vm417, %v363, %v376
        %v419 = vsel %vm417, %v364, %v378
        %vm420 = vcmask 261120
        %v421 = vsel %vm420, %v418, %v388
        %v422 = vsel %vm420, %v419, %v390
        %vm423 = vcmask 392192
        %v424 = vsel %vm423, %v421, %v400
        %v425 = vsel %vm423, %v422, %v402
        %vm426 = vcmask 523264
        %v427 = vsel %vm426, %v424, %v412
        %v428 = vsel %vm426, %v425, %v414
        %v429 = vpack.c.bf16 %v428, %v427
        %v430 = vld [vmem:[%s1] sm:$0xf]
        %v431 = vld [vmem:[%s1 + $0x4] sm:$0xf]
        %v432 = vld [vmem:[%s1 + $0x8] sm:$0xf]
        %v433 = vld [vmem:[%s1 + $0xc] sm:$0xf]
        %v434 = vld [vmem:[%s1 + $0x10] sm:$0xf]
        %v435 = vld [vmem:[%s1 + $0x14] sm:$0xf]
        %v436 = vld [vmem:[%s1 + $0x18] sm:$0xf]
        %v437 = vld [vmem:[%s1 + $0x1c] sm:$0xf]
        %v438 = vld [vmem:[%s1 + $0x20] sm:$0xf]
        %v439 = vld [vmem:[%s1 + $0x24] sm:$0xf]
        %v440 = vld [vmem:[%s2] sm:$0x1]
        %v442 = vlaneseq
        %v443 = vshrl.u32 %v442, 7
        %v444 = vsub.s32 0, %v443
        %v445 = vrot.slane %v440, %v444
        %v457 = vunpack.c.l.b16 %v430
        %v458 = vunpack.c.l.b16 %v431
        %v459 = vunpack.c.l.b16 %v432
        %v460 = vunpack.c.l.b16 %v433
        %v461 = vunpack.c.l.b16 %v434
        %v462 = vunpack.c.l.b16 %v435
        %v463 = vunpack.c.l.b16 %v436
        %v464 = vunpack.c.l.b16 %v437
        %v465 = vunpack.c.l.b16 %v438
        %v466 = vunpack.c.l.b16 %v439
        %v467 = vpack.c.b16 %v458, %v457
        %v468 = vpack.c.b16 %v460, %v459
        %v469 = vpack.c.b16 %v462, %v461
        %v470 = vpack.c.b16 %v464, %v463
        %v471 = vpack.c.b16 %v466, %v465
        %vm477 = vcmask 654336
        %v479 = vsel %vm477, %v429, 0
        %481 = vmatprep.subr.bf16.mxu0 0
        %482 = vmatpush1.bf16.msra.mxu0 %v467
        %483 = vmatprep.subr.bf16.mxu0 0
        %484 = vmatpush1.bf16.msra.mxu0 %v468
        %485 = vmatprep.subr.bf16.mxu0 0
        %486 = vmatpush1.bf16.msra.mxu0 %v469
        %487 = vmatprep.subr.bf16.mxu0 0
        %488 = vmatpush1.bf16.msra.mxu0 %v470
        %489 = vmatprep.subr.bf16.mxu0 0
        %490 = vmatpush1.bf16.msra.mxu0 %v471
        %491 = vmatprep.subr.bf16.mxu0 0
        %492 = vmatpush1.bf16.msra.mxu0 0
        %493 = vmatprep.subr.bf16.mxu0 0
        %494 = vmatpush1.bf16.msra.mxu0 0
        %495 = vmatprep.subr.bf16.mxu0 0
        %496 = vmatpush1.bf16.msra.mxu0 0
        %497 = vmatprep.subr.bf16.mxu0 0
        %498 = vmatpush1.bf16.msra.mxu0 0
        %499 = vmatprep.subr.bf16.mxu0 0
        %500 = vmatpush1.bf16.msra.mxu0 0
        %501 = vmatprep.subr.bf16.mxu0 0
        %502 = vmatpush1.bf16.msra.mxu0 0
        %503 = vmatprep.subr.bf16.mxu0 0
        %504 = vmatpush1.bf16.msra.mxu0 0
        %505 = vmatprep.subr.bf16.mxu0 0
        %506 = vmatpush1.bf16.msra.mxu0 0
        %507 = vmatprep.subr.bf16.mxu0 0
        %508 = vmatpush1.bf16.msra.mxu0 0
        %509 = vmatprep.subr.bf16.mxu0 0
        %510 = vmatpush1.bf16.msra.mxu0 0
        %511 = vmatprep.subr.bf16.mxu0 0
        %512 = vmatpush1.bf16.msra.mxu0 0
        %513 = vmatprep.mubr.bf16.mxu0 0
        %514 = vmatmul.mubr.bf16.gmra.mrb[0].mxu0 %v479
        %v515 = vpop.f32.mrb[0].mxu0
        %v516 = vadd.f32 %v445, %v515
        %v517 = vpop.f32.mrb[0].mxu0
        %v518 = vpop.f32.mrb[0].mxu0
        %v519 = vadd.f32 %v445, %v518
        %v520 = vpop.f32.mrb[0].mxu0
        %521 = vdwg.mxu0
        %v522 = vmax.f32 %v516, 0.0
        %v523 = vmax.f32 %v519, 0.0
        %v524 = vld [vmem:[%s5] sm:$0x3]
        %v525 = vpack.c.bf16 %v523, %v522
        %v526 = vld [vmem:[%s3] sm:$0xf]
        %v527 = vld [vmem:[%s3 + $0x4] sm:$0xf]
        %v528 = vld [vmem:[%s3 + $0x8] sm:$0xf]
        %v529 = vld [vmem:[%s3 + $0xc] sm:$0xf]
        %v530 = vlaneseq
        %v531 = vshrl.u32 %v530, 7
        %v532 = vsub.s32 0, %v531
        %v533 = vrot.slane %v524, %v532
        %v538 = vunpack.c.l.b16 %v526
        %v539 = vunpack.c.l.b16 %v527
        %v540 = vunpack.c.l.b16 %v528
        %v541 = vunpack.c.l.b16 %v529
        %v542 = vpack.c.b16 %v539, %v538
        %v543 = vpack.c.b16 %v541, %v540
        %v547 = vsel %vm420, %v525, 0
        %549 = vmatprep.subr.bf16.mxu0 0
        %550 = vmatpush1.bf16.msra.mxu0 %v542
        %551 = vmatprep.subr.bf16.mxu0 0
        %552 = vmatpush1.bf16.msra.mxu0 %v543
        %553 = vmatprep.subr.bf16.mxu0 0
        %554 = vmatpush1.bf16.msra.mxu0 0
        %555 = vmatprep.subr.bf16.mxu0 0
        %556 = vmatpush1.bf16.msra.mxu0 0
        %557 = vmatprep.subr.bf16.mxu0 0
        %558 = vmatpush1.bf16.msra.mxu0 0
        %559 = vmatprep.subr.bf16.mxu0 0
        %560 = vmatpush1.bf16.msra.mxu0 0
        %561 = vmatprep.subr.bf16.mxu0 0
        %562 = vmatpush1.bf16.msra.mxu0 0
        %563 = vmatprep.subr.bf16.mxu0 0
        %564 = vmatpush1.bf16.msra.mxu0 0
        %565 = vmatprep.subr.bf16.mxu0 0
        %566 = vmatpush1.bf16.msra.mxu0 0
        %567 = vmatprep.subr.bf16.mxu0 0
        %568 = vmatpush1.bf16.msra.mxu0 0
        %569 = vmatprep.subr.bf16.mxu0 0
        %570 = vmatpush1.bf16.msra.mxu0 0
        %571 = vmatprep.subr.bf16.mxu0 0
        %572 = vmatpush1.bf16.msra.mxu0 0
        %573 = vmatprep.subr.bf16.mxu0 0
        %574 = vmatpush1.bf16.msra.mxu0 0
        %575 = vmatprep.subr.bf16.mxu0 0
        %576 = vmatpush1.bf16.msra.mxu0 0
        %577 = vmatprep.subr.bf16.mxu0 0
        %578 = vmatpush1.bf16.msra.mxu0 0
        %579 = vmatprep.subr.bf16.mxu0 0
        %580 = vmatpush1.bf16.msra.mxu0 0
        %581 = vmatprep.mubr.bf16.mxu0 0
        %582 = vmatmul.mubr.bf16.gmra.mrb[0].mxu0 %v547
        %v583 = vpop.f32.mrb[0].mxu0
        %v584 = vadd.f32 %v533, %v583
        %v585 = vpop.f32.mrb[0].mxu0
        %v586 = vpop.f32.mrb[0].mxu0
        %v587 = vadd.f32 %v533, %v586
        %v588 = vpop.f32.mrb[0].mxu0
        %589 = vdwg.mxu0
        %v590 = vmax.f32 %v584, 0.0
        %v591 = vmax.f32 %v587, 0.0
        %v592 = vpack.c.bf16 %v591, %v590
        %v593 = vld [vmem:[%s4] sm:$0xf]
        %v594 = vld [vmem:[%s4 + $0x4] sm:$0xf]
        %v595 = vld [vmem:[%s4 + $0x8] sm:$0xf]
        %v596 = vld [vmem:[%s4 + $0xc] sm:$0xf]
        %v601 = vunpack.c.l.b16 %v593
        %v602 = vunpack.c.l.b16 %v594
        %v603 = vunpack.c.l.b16 %v595
        %v604 = vunpack.c.l.b16 %v596
        %v605 = vpack.c.b16 %v602, %v601
        %v606 = vpack.c.b16 %v604, %v603
        %v610 = vsel %vm420, %v592, 0
        %612 = vmatprep.subr.bf16.mxu0 0
        %613 = vmatpush1.bf16.msra.mxu0 %v605
        %614 = vmatprep.subr.bf16.mxu0 0
        %615 = vmatpush1.bf16.msra.mxu0 %v606
        %616 = vmatprep.subr.bf16.mxu0 0
        %617 = vmatpush1.bf16.msra.mxu0 0
        %618 = vmatprep.subr.bf16.mxu0 0
        %619 = vmatpush1.bf16.msra.mxu0 0
        %620 = vmatprep.subr.bf16.mxu0 0
        %621 = vmatpush1.bf16.msra.mxu0 0
        %622 = vmatprep.subr.bf16.mxu0 0
        %623 = vmatpush1.bf16.msra.mxu0 0
        %624 = vmatprep.subr.bf16.mxu0 0
        %625 = vmatpush1.bf16.msra.mxu0 0
        %626 = vmatprep.subr.bf16.mxu0 0
        %627 = vmatpush1.bf16.msra.mxu0 0
        %628 = vmatprep.subr.bf16.mxu0 0
        %629 = vmatpush1.bf16.msra.mxu0 0
        %630 = vmatprep.subr.bf16.mxu0 0
        %631 = vmatpush1.bf16.msra.mxu0 0
        %632 = vmatprep.subr.bf16.mxu0 0
        %633 = vmatpush1.bf16.msra.mxu0 0
        %634 = vmatprep.subr.bf16.mxu0 0
        %635 = vmatpush1.bf16.msra.mxu0 0
        %636 = vmatprep.subr.bf16.mxu0 0
        %637 = vmatpush1.bf16.msra.mxu0 0
        %638 = vmatprep.subr.bf16.mxu0 0
        %639 = vmatpush1.bf16.msra.mxu0 0
        %640 = vmatprep.subr.bf16.mxu0 0
        %641 = vmatpush1.bf16.msra.mxu0 0
        %642 = vmatprep.subr.bf16.mxu0 0
        %643 = vmatpush1.bf16.msra.mxu0 0
        %644 = vmatprep.mubr.bf16.mxu0 0
        %645 = vmatmul.mubr.bf16.gmra.mrb[0].mxu0 %v610
        %v646 = vpop.f32.mrb[0].mxu0
        %v647 = vadd.f32 0.0, %v646
        %v648 = vpop.f32.mrb[0].mxu0
        %v649 = vpop.f32.mrb[0].mxu0
        %v650 = vadd.f32 0.0, %v649
        %v651 = vpop.f32.mrb[0].mxu0
        %652 = vdwg.mxu0
        %v653 = vadd.f32 %v522, %v647
        %v654 = vadd.f32 %v523, %v650
        %v655 = vlaneseq
        %v656 = vshrl.u32 %v655, 7
        %v657 = vsub.s32 1, %v656
        %v658 = vrot.slane %v524, %v657
        %v659 = vadd.f32 %v653, %v658
        %v660 = vadd.f32 %v654, %v658
        %s661 = scalar_lea.vmem %s5, 2
        %v662 = vld [vmem:[%s661] sm:$0x3]
        %v663 = vpack.c.bf16 %v660, %v659
        %s664 = scalar_lea.vmem %s3, 16
        %v665 = vld [vmem:[%s664] sm:$0xf]
        %v666 = vld [vmem:[%s664 + $0x4] sm:$0xf]
        %v667 = vld [vmem:[%s664 + $0x8] sm:$0xf]
        %v668 = vld [vmem:[%s664 + $0xc] sm:$0xf]
        %v669 = vlaneseq
        %v670 = vshrl.u32 %v669, 7
        %v671 = vsub.s32 0, %v670
        %v672 = vrot.slane %v662, %v671
        %v677 = vunpack.c.l.b16 %v665
        %v678 = vunpack.c.l.b16 %v666
        %v679 = vunpack.c.l.b16 %v667
        %v680 = vunpack.c.l.b16 %v668
        %v681 = vpack.c.b16 %v678, %v677
        %v682 = vpack.c.b16 %v680, %v679
        %v686 = vsel %vm420, %v663, 0
        %688 = vmatprep.subr.bf16.mxu0 0
        %689 = vmatpush1.bf16.msra.mxu0 %v681
        %690 = vmatprep.subr.bf16.mxu0 0
        %691 = vmatpush1.bf16.msra.mxu0 %v682
        %692 = vmatprep.subr.bf16.mxu0 0
        %693 = vmatpush1.bf16.msra.mxu0 0
        %694 = vmatprep.subr.bf16.mxu0 0
        %695 = vmatpush1.bf16.msra.mxu0 0
        %696 = vmatprep.subr.bf16.mxu0 0
        %697 = vmatpush1.bf16.msra.mxu0 0
        %698 = vmatprep.subr.bf16.mxu0 0
        %699 = vmatpush1.bf16.msra.mxu0 0
        %700 = vmatprep.subr.bf16.mxu0 0
        %701 = vmatpush1.bf16.msra.mxu0 0
        %702 = vmatprep.subr.bf16.mxu0 0
        %703 = vmatpush1.bf16.msra.mxu0 0
        %704 = vmatprep.subr.bf16.mxu0 0
        %705 = vmatpush1.bf16.msra.mxu0 0
        %706 = vmatprep.subr.bf16.mxu0 0
        %707 = vmatpush1.bf16.msra.mxu0 0
        %708 = vmatprep.subr.bf16.mxu0 0
        %709 = vmatpush1.bf16.msra.mxu0 0
        %710 = vmatprep.subr.bf16.mxu0 0
        %711 = vmatpush1.bf16.msra.mxu0 0
        %712 = vmatprep.subr.bf16.mxu0 0
        %713 = vmatpush1.bf16.msra.mxu0 0
        %714 = vmatprep.subr.bf16.mxu0 0
        %715 = vmatpush1.bf16.msra.mxu0 0
        %716 = vmatprep.subr.bf16.mxu0 0
        %717 = vmatpush1.bf16.msra.mxu0 0
        %718 = vmatprep.subr.bf16.mxu0 0
        %719 = vmatpush1.bf16.msra.mxu0 0
        %720 = vmatprep.mubr.bf16.mxu0 0
        %721 = vmatmul.mubr.bf16.gmra.mrb[0].mxu0 %v686
        %v722 = vpop.f32.mrb[0].mxu0
        %v723 = vadd.f32 %v672, %v722
        %v724 = vpop.f32.mrb[0].mxu0
        %v725 = vpop.f32.mrb[0].mxu0
        %v726 = vadd.f32 %v672, %v725
        %v727 = vpop.f32.mrb[0].mxu0
        %728 = vdwg.mxu0
        %v729 = vmax.f32 %v723, 0.0
        %v730 = vmax.f32 %v726, 0.0
        %v731 = vpack.c.bf16 %v730, %v729
        %s732 = scalar_lea.vmem %s4, 16
        %v733 = vld [vmem:[%s732] sm:$0xf]
        %v734 = vld [vmem:[%s732 + $0x4] sm:$0xf]
        %v735 = vld [vmem:[%s732 + $0x8] sm:$0xf]
        %v736 = vld [vmem:[%s732 + $0xc] sm:$0xf]
        %v741 = vunpack.c.l.b16 %v733
        %v742 = vunpack.c.l.b16 %v734
        %v743 = vunpack.c.l.b16 %v735
        %v744 = vunpack.c.l.b16 %v736
        %v745 = vpack.c.b16 %v742, %v741
        %v746 = vpack.c.b16 %v744, %v743
        %v750 = vsel %vm420, %v731, 0
        %752 = vmatprep.subr.bf16.mxu0 0
        %753 = vmatpush1.bf16.msra.mxu0 %v745
        %754 = vmatprep.subr.bf16.mxu0 0
        %755 = vmatpush1.bf16.msra.mxu0 %v746
        %756 = vmatprep.subr.bf16.mxu0 0
        %757 = vmatpush1.bf16.msra.mxu0 0
        %758 = vmatprep.subr.bf16.mxu0 0
        %759 = vmatpush1.bf16.msra.mxu0 0
        %760 = vmatprep.subr.bf16.mxu0 0
        %761 = vmatpush1.bf16.msra.mxu0 0
        %762 = vmatprep.subr.bf16.mxu0 0
        %763 = vmatpush1.bf16.msra.mxu0 0
        %764 = vmatprep.subr.bf16.mxu0 0
        %765 = vmatpush1.bf16.msra.mxu0 0
        %766 = vmatprep.subr.bf16.mxu0 0
        %767 = vmatpush1.bf16.msra.mxu0 0
        %768 = vmatprep.subr.bf16.mxu0 0
        %769 = vmatpush1.bf16.msra.mxu0 0
        %770 = vmatprep.subr.bf16.mxu0 0
        %771 = vmatpush1.bf16.msra.mxu0 0
        %772 = vmatprep.subr.bf16.mxu0 0
        %773 = vmatpush1.bf16.msra.mxu0 0
        %774 = vmatprep.subr.bf16.mxu0 0
        %775 = vmatpush1.bf16.msra.mxu0 0
        %776 = vmatprep.subr.bf16.mxu0 0
        %777 = vmatpush1.bf16.msra.mxu0 0
        %778 = vmatprep.subr.bf16.mxu0 0
        %779 = vmatpush1.bf16.msra.mxu0 0
        %780 = vmatprep.subr.bf16.mxu0 0
        %781 = vmatpush1.bf16.msra.mxu0 0
        %782 = vmatprep.subr.bf16.mxu0 0
        %783 = vmatpush1.bf16.msra.mxu0 0
        %784 = vmatprep.mubr.bf16.mxu0 0
        %785 = vmatmul.mubr.bf16.gmra.mrb[0].mxu0 %v750
        %v786 = vpop.f32.mrb[0].mxu0
        %v787 = vadd.f32 0.0, %v786
        %v788 = vpop.f32.mrb[0].mxu0
        %v789 = vpop.f32.mrb[0].mxu0
        %v790 = vadd.f32 0.0, %v789
        %v791 = vpop.f32.mrb[0].mxu0
        %792 = vdwg.mxu0
        %v793 = vadd.f32 %v659, %v787
        %v794 = vadd.f32 %v660, %v790
        %v795 = vlaneseq
        %v796 = vshrl.u32 %v795, 7
        %v797 = vsub.s32 1, %v796
        %v798 = vrot.slane %v662, %v797
        %v799 = vadd.f32 %v793, %v798
        %v800 = vadd.f32 %v794, %v798
        %v801 = vpack.c.bf16 %v800, %v799
        %v802 = vld [vmem:[%s6] sm:$0xf]
        %v803 = vld [vmem:[%s6 + $0x4] sm:$0xf]
        %v804 = vld [vmem:[%s6 + $0x8] sm:$0xf]
        %v805 = vld [vmem:[%s6 + $0xc] sm:$0xf]
        %v806 = vld [vmem:[%s7] sm:$0x1]
        %v808 = vlaneseq
        %v809 = vshrl.u32 %v808, 7
        %v810 = vsub.s32 0, %v809
        %v811 = vrot.slane %v806, %v810
        %v817 = vunpack.c.l.b16 %v802
        %v818 = vunpack.c.l.b16 %v803
        %v819 = vunpack.c.l.b16 %v804
        %v820 = vunpack.c.l.b16 %v805
        %v821 = vpack.c.b16 %v818, %v817
        %v822 = vpack.c.b16 %v820, %v819
        %v826 = vsel %vm420, %v801, 0
        %828 = vmatprep.subr.bf16.mxu0 0
        %829 = vmatpush1.bf16.msra.mxu0 %v821
        %830 = vmatprep.subr.bf16.mxu0 0
        %831 = vmatpush1.bf16.msra.mxu0 %v822
        %832 = vmatprep.subr.bf16.mxu0 0
        %833 = vmatpush1.bf16.msra.mxu0 0
        %834 = vmatprep.subr.bf16.mxu0 0
        %835 = vmatpush1.bf16.msra.mxu0 0
        %836 = vmatprep.subr.bf16.mxu0 0
        %837 = vmatpush1.bf16.msra.mxu0 0
        %838 = vmatprep.subr.bf16.mxu0 0
        %839 = vmatpush1.bf16.msra.mxu0 0
        %840 = vmatprep.subr.bf16.mxu0 0
        %841 = vmatpush1.bf16.msra.mxu0 0
        %842 = vmatprep.subr.bf16.mxu0 0
        %843 = vmatpush1.bf16.msra.mxu0 0
        %844 = vmatprep.subr.bf16.mxu0 0
        %845 = vmatpush1.bf16.msra.mxu0 0
        %846 = vmatprep.subr.bf16.mxu0 0
        %847 = vmatpush1.bf16.msra.mxu0 0
        %848 = vmatprep.subr.bf16.mxu0 0
        %849 = vmatpush1.bf16.msra.mxu0 0
        %850 = vmatprep.subr.bf16.mxu0 0
        %851 = vmatpush1.bf16.msra.mxu0 0
        %852 = vmatprep.subr.bf16.mxu0 0
        %853 = vmatpush1.bf16.msra.mxu0 0
        %854 = vmatprep.subr.bf16.mxu0 0
        %855 = vmatpush1.bf16.msra.mxu0 0
        %856 = vmatprep.subr.bf16.mxu0 0
        %857 = vmatpush1.bf16.msra.mxu0 0
        %858 = vmatprep.subr.bf16.mxu0 0
        %859 = vmatpush1.bf16.msra.mxu0 0
        %860 = vmatprep.mubr.bf16.mxu0 0
        %861 = vmatmul.mubr.bf16.gmra.mrb[0].mxu0 %v826
        %v862 = vpop.f32.mrb[0].mxu0
        %v863 = vadd.f32 %v811, %v862
        %v864 = vpop.f32.mrb[0].mxu0
        %v865 = vpop.f32.mrb[0].mxu0
        %v866 = vadd.f32 %v811, %v865
        %v867 = vpop.f32.mrb[0].mxu0
        %868 = vdwg.mxu0
        %871 = vrot.lane.b32.xlu0 %v863, 16
        %v872 = vpop.permute.xlu0 %871
        %873 = vrot.lane.b32.xlu0 %v866, 16
        %v874 = vpop.permute.xlu0 %873
        %877 = vrot.lane.b32.xlu0 %v863, 32
        %v878 = vpop.permute.xlu0 %877
        %879 = vrot.lane.b32.xlu0 %v866, 32
        %v880 = vpop.permute.xlu0 %879
        %883 = vrot.lane.b32.xlu0 %v863, 48
        %v884 = vpop.permute.xlu0 %883
        %885 = vrot.lane.b32.xlu0 %v866, 48
        %v886 = vpop.permute.xlu0 %885
        %889 = vrot.lane.b32.xlu0 %v863, 64
        %v890 = vpop.permute.xlu0 %889
        %891 = vrot.lane.b32.xlu0 %v866, 64
        %v892 = vpop.permute.xlu0 %891
        %895 = vrot.lane.b32.xlu0 %v863, 80
        %v896 = vpop.permute.xlu0 %895
        %897 = vrot.lane.b32.xlu0 %v866, 80
        %v898 = vpop.permute.xlu0 %897
        %901 = vrot.lane.b32.xlu0 %v863, 96
        %v902 = vpop.permute.xlu0 %901
        %903 = vrot.lane.b32.xlu0 %v866, 96
        %v904 = vpop.permute.xlu0 %903
        %907 = vrot.lane.b32.xlu0 %v863, 112
        %v908 = vpop.permute.xlu0 %907
        %909 = vrot.lane.b32.xlu0 %v866, 112
        %v910 = vpop.permute.xlu0 %909
        %v913 = vsel %vm417, %v863, %v872
        %v914 = vsel %vm417, %v866, %v874
        %v915 = vsel %vm420, %v913, %v878
        %v916 = vsel %vm420, %v914, %v880
        %v917 = vsel %vm423, %v915, %v884
        %v918 = vsel %vm423, %v916, %v886
        %v919 = vsel %vm426, %v917, %v890
        %v920 = vsel %vm426, %v918, %v892
        %v921 = vsel %vm477, %v919, %v896
        %v922 = vsel %vm477, %v920, %v898
        %vm923 = vcmask 785408
        %v924 = vsel %vm923, %v921, %v902
        %v925 = vsel %vm923, %v922, %v904
        %vm926 = vcmask 916480
        %v927 = vsel %vm926, %v924, %v908
        %v928 = vsel %vm926, %v925, %v910
        %v929 = vpack.c.bf16 %v928, %v927
        %v931 = vunpack.c.l.b16 %v929
        %v932 = vunpack.c.h.b16 %v929
        %v933 = vpack.c.b16 %v931, %v931
        %v934 = vpack.c.b16 %v932, %v932
        %937 = vst [vmem:[%s352] sm:$0xf] %v933
        %938 = vst [vmem:[%s352 + $0x4] sm:$0xf] %v934
        %v939 = vmul.f32 %v363, 0.08888889
        %v940 = vmul.f32 %v364, 0.08888889
        %v941 = vmul.f32 %v363, 0.37777779
        %v942 = vmul.f32 %v364, 0.37777779
        %v943 = vmul.f32 %v365, 0.37777779
        %v947 = vrot.slane %v941, 1
        %v948 = vrot.slane %v942, 1
        %v949 = vsel %vm369, %v947, %v948
        %v950 = vrot.slane %v943, 1
        %v951 = vsel %vm369, %v948, %v950
        %v954 = vadd.f32 %v939, %v949
        %v955 = vadd.f32 %v940, %v951
        %v956 = vmul.f32 %v363, 0.4
        %v957 = vmul.f32 %v364, 0.4
        %v958 = vmul.f32 %v365, 0.4
        %v962 = vrot.slane %v956, 2
        %v963 = vrot.slane %v957, 2
        %v964 = vsel %vm381, %v962, %v963
        %v965 = vrot.slane %v958, 2
        %v966 = vsel %vm381, %v963, %v965
        %v969 = vadd.f32 %v954, %v964
        %v970 = vadd.f32 %v955, %v966
        %v971 = vmul.f32 %v363, 0.13333334
        %v972 = vmul.f32 %v364, 0.13333334
        %v973 = vmul.f32 %v365, 0.13333334
        %v977 = vrot.slane %v971, 3
        %v978 = vrot.slane %v972, 3
        %v979 = vsel %vm393, %v977, %v978
        %v980 = vrot.slane %v973, 3
        %v981 = vsel %vm393, %v978, %v980
        %v984 = vadd.f32 %v969, %v979
        %v985 = vadd.f32 %v970, %v981
        %v986 = vmul.f32 %v363, 0.0
        %v987 = vmul.f32 %v364, 0.0
        %v988 = vmul.f32 %v365, 0.0
        %v992 = vrot.slane %v986, 4
        %v993 = vrot.slane %v987, 4
        %v994 = vsel %vm405, %v992, %v993
        %v995 = vrot.slane %v988, 4
        %v996 = vsel %vm405, %v993, %v995
        %v999 = vadd.f32 %v984, %v994
        %v1000 = vadd.f32 %v985, %v996
        %v1001 = vmul.f32 %v363, 0.06666667
        %v1002 = vmul.f32 %v364, 0.06666667
        %v1003 = vmul.f32 %v363, 0.35555556
        %v1004 = vmul.f32 %v364, 0.35555556
        %v1005 = vmul.f32 %v365, 0.35555556
        %v1009 = vrot.slane %v1003, 1
        %v1010 = vrot.slane %v1004, 1
        %v1011 = vsel %vm369, %v1009, %v1010
        %v1012 = vrot.slane %v1005, 1
        %v1013 = vsel %vm369, %v1010, %v1012
        %v1016 = vadd.f32 %v1001, %v1011
        %v1017 = vadd.f32 %v1002, %v1013
        %v1018 = vadd.f32 %v1016, %v964
        %v1019 = vadd.f32 %v1017, %v966
        %v1020 = vmul.f32 %v363, 0.17777778
        %v1021 = vmul.f32 %v364, 0.17777778
        %v1022 = vmul.f32 %v365, 0.17777778
        %v1026 = vrot.slane %v1020, 3
        %v1027 = vrot.slane %v1021, 3
        %v1028 = vsel %vm393, %v1026, %v1027
        %v1029 = vrot.slane %v1022, 3
        %v1030 = vsel %vm393, %v1027, %v1029
        %v1033 = vadd.f32 %v1018, %v1028
        %v1034 = vadd.f32 %v1019, %v1030
        %v1035 = vadd.f32 %v1033, %v994
        %v1036 = vadd.f32 %v1034, %v996
        %v1037 = vmul.f32 %v363, 0.044444446
        %v1038 = vmul.f32 %v364, 0.044444446
        %v1039 = vmul.f32 %v363, 0.33333334
        %v1040 = vmul.f32 %v364, 0.33333334
        %v1041 = vmul.f32 %v365, 0.33333334
        %v1045 = vrot.slane %v1039, 1
        %v1046 = vrot.slane %v1040, 1
        %v1047 = vsel %vm369, %v1045, %v1046
        %v1048 = vrot.slane %v1041, 1
        %v1049 = vsel %vm369, %v1046, %v1048
        %v1052 = vadd.f32 %v1037, %v1047
        %v1053 = vadd.f32 %v1038, %v1049
        %v1054 = vadd.f32 %v1052, %v964
        %v1055 = vadd.f32 %v1053, %v966
        %v1056 = vmul.f32 %v363, 0.22222222
        %v1057 = vmul.f32 %v364, 0.22222222
        %v1058 = vmul.f32 %v365, 0.22222222
        %v1062 = vrot.slane %v1056, 3
        %v1063 = vrot.slane %v1057, 3
        %v1064 = vsel %vm393, %v1062, %v1063
        %v1065 = vrot.slane %v1058, 3
        %v1066 = vsel %vm393, %v1063, %v1065
        %v1069 = vadd.f32 %v1054, %v1064
        %v1070 = vadd.f32 %v1055, %v1066
        %v1071 = vadd.f32 %v1069, %v994
        %v1072 = vadd.f32 %v1070, %v996
        %v1073 = vmul.f32 %v363, 0.022222223
        %v1074 = vmul.f32 %v364, 0.022222223
        %v1075 = vmul.f32 %v363, 0.31111112
        %v1076 = vmul.f32 %v364, 0.31111112
        %v1077 = vmul.f32 %v365, 0.31111112
        %v1081 = vrot.slane %v1075, 1
        %v1082 = vrot.slane %v1076, 1
        %v1083 = vsel %vm369, %v1081, %v1082
        %v1084 = vrot.slane %v1077, 1
        %v1085 = vsel %vm369, %v1082, %v1084
        %v1088 = vadd.f32 %v1073, %v1083
        %v1089 = vadd.f32 %v1074, %v1085
        %v1090 = vadd.f32 %v1088, %v964
        %v1091 = vadd.f32 %v1089, %v966
        %v1092 = vmul.f32 %v363, 0.26666668
        %v1093 = vmul.f32 %v364, 0.26666668
        %v1094 = vmul.f32 %v365, 0.26666668
        %v1098 = vrot.slane %v1092, 3
        %v1099 = vrot.slane %v1093, 3
        %v1100 = vsel %vm393, %v1098, %v1099
        %v1101 = vrot.slane %v1094, 3
        %v1102 = vsel %vm393, %v1099, %v1101
        %v1105 = vadd.f32 %v1090, %v1100
        %v1106 = vadd.f32 %v1091, %v1102
        %v1107 = vadd.f32 %v1105, %v994
        %v1108 = vadd.f32 %v1106, %v996
        %v1109 = vrot.slane %v1092, 1
        %v1110 = vrot.slane %v1093, 1
        %v1111 = vsel %vm369, %v1109, %v1110
        %v1112 = vrot.slane %v1094, 1
        %v1113 = vsel %vm369, %v1110, %v1112
        %v1116 = vadd.f32 %v986, %v1111
        %v1117 = vadd.f32 %v987, %v1113
        %v1118 = vadd.f32 %v1116, %v964
        %v1119 = vadd.f32 %v1117, %v966
        %v1120 = vrot.slane %v1075, 3
        %v1121 = vrot.slane %v1076, 3
        %v1122 = vsel %vm393, %v1120, %v1121
        %v1123 = vrot.slane %v1077, 3
        %v1124 = vsel %vm393, %v1121, %v1123
        %v1127 = vadd.f32 %v1118, %v1122
        %v1128 = vadd.f32 %v1119, %v1124
        %v1129 = vmul.f32 %v365, 0.022222223
        %v1133 = vrot.slane %v1073, 4
        %v1134 = vrot.slane %v1074, 4
        %v1135 = vsel %vm405, %v1133, %v1134
        %v1136 = vrot.slane %v1129, 4
        %v1137 = vsel %vm405, %v1134, %v1136
        %v1140 = vadd.f32 %v1127, %v1135
        %v1141 = vadd.f32 %v1128, %v1137
        %v1142 = vrot.slane %v1056, 1
        %v1143 = vrot.slane %v1057, 1
        %v1144 = vsel %vm369, %v1142, %v1143
        %v1145 = vrot.slane %v1058, 1
        %v1146 = vsel %vm369, %v1143, %v1145
        %v1149 = vadd.f32 %v986, %v1144
        %v1150 = vadd.f32 %v987, %v1146
        %v1151 = vadd.f32 %v1149, %v964
        %v1152 = vadd.f32 %v1150, %v966
        %v1153 = vrot.slane %v1039, 3
        %v1154 = vrot.slane %v1040, 3
        %v1155 = vsel %vm393, %v1153, %v1154
        %v1156 = vrot.slane %v1041, 3
        %v1157 = vsel %vm393, %v1154, %v1156
        %v1160 = vadd.f32 %v1151, %v1155
        %v1161 = vadd.f32 %v1152, %v1157
        %v1162 = vmul.f32 %v365, 0.044444446
        %v1166 = vrot.slane %v1037, 4
        %v1167 = vrot.slane %v1038, 4
        %v1168 = vsel %vm405, %v1166, %v1167
        %v1169 = vrot.slane %v1162, 4
        %v1170 = vsel %vm405, %v1167, %v1169
        %v1173 = vadd.f32 %v1160, %v1168
        %v1174 = vadd.f32 %v1161, %v1170
        %v1175 = vrot.slane %v1020, 1
        %v1176 = vrot.slane %v1021, 1
        %v1177 = vsel %vm369, %v1175, %v1176
        %v1178 = vrot.slane %v1022, 1
        %v1179 = vsel %vm369, %v1176, %v1178
        %v1182 = vadd.f32 %v986, %v1177
        %v1183 = vadd.f32 %v987, %v1179
        %v1184 = vadd.f32 %v1182, %v964
        %v1185 = vadd.f32 %v1183, %v966
        %v1186 = vrot.slane %v1003, 3
        %v1187 = vrot.slane %v1004, 3
        %v1188 = vsel %vm393, %v1186, %v1187
        %v1189 = vrot.slane %v1005, 3
        %v1190 = vsel %vm393, %v1187, %v1189
        %v1193 = vadd.f32 %v1184, %v1188
        %v1194 = vadd.f32 %v1185, %v1190
        %v1195 = vmul.f32 %v365, 0.06666667
        %v1199 = vrot.slane %v1001, 4
        %v1200 = vrot.slane %v1002, 4
        %v1201 = vsel %vm405, %v1199, %v1200
        %v1202 = vrot.slane %v1195, 4
        %v1203 = vsel %vm405, %v1200, %v1202
        %v1206 = vadd.f32 %v1193, %v1201
        %v1207 = vadd.f32 %v1194, %v1203
        %v1208 = vrot.slane %v971, 1
        %v1209 = vrot.slane %v972, 1
        %v1210 = vsel %vm369, %v1208, %v1209
        %v1211 = vrot.slane %v973, 1
        %v1212 = vsel %vm369, %v1209, %v1211
        %v1215 = vadd.f32 %v986, %v1210
        %v1216 = vadd.f32 %v987, %v1212
        %v1217 = vadd.f32 %v1215, %v964
        %v1218 = vadd.f32 %v1216, %v966
        %v1219 = vrot.slane %v941, 3
        %v1220 = vrot.slane %v942, 3
        %v1221 = vsel %vm393, %v1219, %v1220
        %v1222 = vrot.slane %v943, 3
        %v1223 = vsel %vm393, %v1220, %v1222
        %v1226 = vadd.f32 %v1217, %v1221
        %v1227 = vadd.f32 %v1218, %v1223
        %v1228 = vmul.f32 %v365, 0.08888889
        %v1232 = vrot.slane %v939, 4
        %v1233 = vrot.slane %v940, 4
        %v1234 = vsel %vm405, %v1232, %v1233
        %v1235 = vrot.slane %v1228, 4
        %v1236 = vsel %vm405, %v1233, %v1235
        %v1239 = vadd.f32 %v1226, %v1234
        %v1240 = vadd.f32 %v1227, %v1236
        %1243 = vrot.lane.b32.xlu0 %v1035, 16
        %v1244 = vpop.permute.xlu0 %1243
        %1245 = vrot.lane.b32.xlu0 %v1036, 16
        %v1246 = vpop.permute.xlu0 %1245
        %1251 = vrot.lane.b32.xlu0 %v1071, 32
        %v1252 = vpop.permute.xlu0 %1251
        %1253 = vrot.lane.b32.xlu0 %v1072, 32
        %v1254 = vpop.permute.xlu0 %1253
        %1259 = vrot.lane.b32.xlu0 %v1107, 48
        %v1260 = vpop.permute.xlu0 %1259
        %1261 = vrot.lane.b32.xlu0 %v1108, 48
        %v1262 = vpop.permute.xlu0 %1261
        %1267 = vrot.lane.b32.xlu0 %v1140, 64
        %v1268 = vpop.permute.xlu0 %1267
        %1269 = vrot.lane.b32.xlu0 %v1141, 64
        %v1270 = vpop.permute.xlu0 %1269
        %1275 = vrot.lane.b32.xlu0 %v1173, 80
        %v1276 = vpop.permute.xlu0 %1275
        %1277 = vrot.lane.b32.xlu0 %v1174, 80
        %v1278 = vpop.permute.xlu0 %1277
        %1283 = vrot.lane.b32.xlu0 %v1206, 96
        %v1284 = vpop.permute.xlu0 %1283
        %1285 = vrot.lane.b32.xlu0 %v1207, 96
        %v1286 = vpop.permute.xlu0 %1285
        %1291 = vrot.lane.b32.xlu0 %v1239, 112
        %v1292 = vpop.permute.xlu0 %1291
        %1293 = vrot.lane.b32.xlu0 %v1240, 112
        %v1294 = vpop.permute.xlu0 %1293
        %v1297 = vsel %vm417, %v999, %v1244
        %v1298 = vsel %vm417, %v1000, %v1246
        %v1299 = vsel %vm420, %v1297, %v1252
        %v1300 = vsel %vm420, %v1298, %v1254
        %v1301 = vsel %vm423, %v1299, %v1260
        %v1302 = vsel %vm423, %v1300, %v1262
        %v1303 = vsel %vm426, %v1301, %v1268
        %v1304 = vsel %vm426, %v1302, %v1270
        %v1305 = vsel %vm477, %v1303, %v1276
        %v1306 = vsel %vm477, %v1304, %v1278
        %v1307 = vsel %vm923, %v1305, %v1284
        %v1308 = vsel %vm923, %v1306, %v1286
        %v1309 = vsel %vm926, %v1307, %v1292
        %v1310 = vsel %vm926, %v1308, %v1294
        %v1311 = vpack.c.bf16 %v1310, %v1309
        %v1313 = vunpack.c.l.b16 %v1311
        %v1314 = vunpack.c.h.b16 %v1311
        %v1315 = vpack.c.b16 %v1313, %v1313
        %v1316 = vpack.c.b16 %v1314, %v1314
        %1319 = vst [vmem:[%s345] sm:$0xf] %v1315
        %1320 = vst [vmem:[%s345 + $0x4] sm:$0xf] %v1316
        %s1321 = sand.u32 %s222, 1
        %s1322 = scalar_lea.sflag [#allocation3], %s1321
        %s1323 = sand.u32 %s222, 1
        %s1324 = smul.addr %s1323, 8
        %s1325 = scalar_lea.vmem [#allocation2], %s1324
        %s1326 = sand.u32 %s250, 1
        %s1327 = scalar_lea.sflag [#allocation5], %s1326
        %s1328 = sand.u32 %s250, 1
        %s1329 = smul.addr %s1328, 8
        %s1330 = scalar_lea.vmem [#allocation4], %s1329
        // Predicated region
        $region53: #{tpu_custom_call.1} parent=51 // pred_check
          %p1331 = pneg %p232
        $region54: #{tpu_custom_call.1} parent=51 // pred_check_branch
          %1333 = sbr.rel (%p1331) target = $region56
        $region55: #{tpu_custom_call.1} parent=51 // pred_region
          %s1334 = smul.u32 2, %s32
          %s1336 = ssub.s32 128, 128
          %1337 = vsyncadd %s1322, %s1336
          %s1338 = smul.addr %s31, 2
          %s1339 = sadd.s32 %s1334, %s1338
          %s1340 = smul.addr %s1339, 64
          %s1341 = scalar_lea.hbm %s8, %s1340
          %s1342 = sshll.u32 %s1325, 4
          %s1343 = int_to_ptr.vmem [resolvable:$true] %s1342
          %1348 = dma.vmem_to_hbm [thread:$0]  %s1343, 128, %s1341, %s1322, 64, 64, 4
        $region56: #{tpu_custom_call.1} parent=51 // pred_fallthru
          _
        // Predicated region
        $region57: #{tpu_custom_call.1} parent=51 // pred_check
          %p1349 = pneg %p260
        $region58: #{tpu_custom_call.1} parent=51 // pred_check_branch
          %1351 = sbr.rel (%p1349) target = $region60
        $region59: #{tpu_custom_call.1} parent=51 // pred_region
          %s1352 = smul.u32 2, %s32
          %s1354 = ssub.s32 128, 128
          %1355 = vsyncadd %s1327, %s1354
          %s1356 = smul.addr %s31, 2
          %s1357 = sadd.s32 %s1352, %s1356
          %s1358 = smul.addr %s1357, 64
          %s1359 = scalar_lea.hbm %s9, %s1358
          %s1360 = sshll.u32 %s1330, 4
          %s1361 = int_to_ptr.vmem [resolvable:$true] %s1360
          %1366 = dma.vmem_to_hbm [thread:$0]  %s1361, 128, %s1359, %s1327, 64, 64, 4
        $region60: #{tpu_custom_call.1} parent=51 // pred_fallthru
          _
      $region52: #{tpu_custom_call.1} parent=5 // pred_fallthru
        _
      %p1367 = scmp.le.s32.totalorder 2, %s22
      // Predicated region
      $region61: #{tpu_custom_call.1} parent=5 // pred_check
        %p1368 = pneg %p1367
      $region62: #{tpu_custom_call.1} parent=5 // pred_check_branch
        %1370 = sbr.rel (%p1368) target = $region64
      $region63: #{tpu_custom_call.1} parent=5 // pred_region
        %s1371 = ssub.s32 %s22, 2
        // Predicated region
        $region65: #{tpu_custom_call.1} parent=63 // pred_check
          %p1372 = pneg %p238
        $region66: #{tpu_custom_call.1} parent=63 // pred_check_branch
          %1374 = sbr.rel (%p1372) target = $region68
        $region67: #{tpu_custom_call.1} parent=63 // pred_region
          %s1375 = sand.u32 %s223, 1
          %s1376 = scalar_lea.sflag [#allocation3], %s1375
          %s1377 = sand.u32 %s223, 1
          %s1378 = smul.addr %s1377, 8
          %s1379 = scalar_lea.vmem [#allocation2], %s1378
          %1380 = dma.done %s1376, 128
        $region68: #{tpu_custom_call.1} parent=63 // pred_fallthru
          _
        // Predicated region
        $region69: #{tpu_custom_call.1} parent=63 // pred_check
          %p1381 = pneg %p266
        $region70: #{tpu_custom_call.1} parent=63 // pred_check_branch
          %1383 = sbr.rel (%p1381) target = $region72
        $region71: #{tpu_custom_call.1} parent=63 // pred_region
          %s1384 = sand.u32 %s251, 1
          %s1385 = scalar_lea.sflag [#allocation5], %s1384
          %s1386 = sand.u32 %s251, 1
          %s1387 = smul.addr %s1386, 8
          %s1388 = scalar_lea.vmem [#allocation4], %s1387
          %1389 = dma.done %s1385, 128
        $region72: #{tpu_custom_call.1} parent=63 // pred_fallthru
          _
      $region64: #{tpu_custom_call.1} parent=5 // pred_fallthru
        _
    $region6: #{tpu_custom_call.1} parent=1 // loop_footer
      %s26 = sadd.s32 1, %s22
    $region7: #{tpu_custom_call.1} parent=1 // loop_footer_branch
      %21 = sbr.rel target = $region3
    $region8: #{tpu_custom_call.1} parent=1 // loop_exit
      _
    %1390 = vsyncpa [#allocation3], 1
    %s1391 = scalar_lea.sflag [#allocation3], 1
    %1392 = vsyncpa %s1391, 1
    %1393 = vsyncpa [#allocation5], 1
    %s1394 = scalar_lea.sflag [#allocation5], 1
    %1395 = vsyncpa %s1394, 1

</llo_original>
